<compile_context>
chip_gen: v7x
topology: tpu7x:2x2x1
jax: 0.10.0
libtpu: 0.0.40
codegen_flags: <defaults>
</compile_context>

<pallas_src>
import math
import functools

import jax
import jax.numpy as jnp
from jax import lax
from jax.experimental import pallas as pl
from jax.experimental.pallas import tpu as pltpu


def _layer_norm(x, gamma, beta, eps=1e-5):
    mu = jnp.mean(x, axis=-1, keepdims=True)
    var = jnp.mean((x - mu) ** 2, axis=-1, keepdims=True)
    return (x - mu) * lax.rsqrt(var + eps) * gamma + beta


def _transformer_encoder_kernel(
    x_ref,                              # (Bt, S, W) f32
    wqv_ref, bqv_ref,                   # (W, 2W) bf16 / (1, 2W) f32
    wo_ref, bo_ref,                     # (W, W) bf16 / (1, W) f32
    g1_ref, be1_ref, g2_ref, be2_ref,   # LayerNorm 1 / 2 params, (1, W) f32
    w1_ref, b1_ref, w2_ref, b2_ref,     # MLP: (W,4W) bf16, (1,4W) f32, (4W,W) bf16, (1,W) f32
    out_ref,                            # (Bt, S, W)
    *, n_heads,
):
    f32 = jnp.float32
    bf16 = jnp.bfloat16
    H = n_heads

    Bt, S, W = x_ref.shape
    hs = W // H
    R = Bt * S

    # Fold the batch tile into the matmul M dimension.
    x = x_ref[...].reshape(R, W)                             # (R, W) f32

    # ---------------- ln1 (f32 stats) ----------------
    h = _layer_norm(x, g1_ref[...], be1_ref[...])
    hb = h.astype(bf16)

    # ---------------- lane-dense fused Q/V projection ----------------
    # (K = Q per the reference; 1/sqrt(hs) already folded into wq/bq.)
    qv = jnp.dot(hb, wqv_ref[...], preferred_element_type=f32) + bqv_ref[...]
    qvb = qv.astype(bf16)                                    # (R, 2W)

    # Split heads out into a leading batch axis for the attention matmuls
    # (static sublane/lane slices + leading-dim stack; cheap at these sizes).
    q_parts, v_parts = [], []
    for b in range(Bt):
        r0 = b * S
        for hh in range(H):
            c0 = hh * hs
            q_parts.append(qvb[r0:r0 + S, c0:c0 + hs])
            v_parts.append(qvb[r0:r0 + S, W + c0:W + c0 + hs])
    q = jnp.stack(q_parts, axis=0)                           # (Bt*H, S, hs) bf16
    v = jnp.stack(v_parts, axis=0)                           # (Bt*H, S, hs) bf16

    # ---------------- attention: softmax(Q Q^T) V, batched over Bt*H --------
    scores = lax.dot_general(q, q, (((2,), (2,)), ((0,), (0,))),
                             preferred_element_type=f32)     # (Bt*H, S, S)
    scores = scores - jnp.max(scores, axis=-1, keepdims=True)
    p = jnp.exp(scores)
    inv_denom = pl.reciprocal(jnp.sum(p, axis=-1, keepdims=True), approx=True)
    att = (p * inv_denom).astype(bf16)                       # (Bt*H, S, S)
    o = lax.dot_general(att, v, (((2,), (1,)), ((0,), (0,))),
                        preferred_element_type=f32)          # (Bt*H, S, hs)
    o = o.astype(bf16)

    # ---------------- output projection: single dense K = W matmul ----------
    rows = [jnp.concatenate([o[b * H + hh] for hh in range(H)], axis=-1)
            for b in range(Bt)]                              # Bt x (S, W)
    mha_in = jnp.concatenate(rows, axis=0)                   # (R, W) bf16
    mha = jnp.dot(mha_in, wo_ref[...], preferred_element_type=f32) + bo_ref[...]

    x = x + mha                                              # residual (f32)

    # ---------------- ln2 + MLP (no residual, per reference) ----------------
    h2 = _layer_norm(x, g2_ref[...], be2_ref[...]).astype(bf16)
    m = jnp.dot(h2, w1_ref[...], preferred_element_type=f32) + b1_ref[...]
    c = math.sqrt(2.0 / math.pi)
    m = 0.5 * m * (1.0 + jnp.tanh(c * (m + 0.044715 * (m * m * m))))   # tanh GELU
    y = jnp.dot(m.astype(bf16), w2_ref[...], preferred_element_type=f32) + b2_ref[...]

    out_ref[...] = y.reshape(Bt, S, W).astype(out_ref.dtype)


def _pick_batch_tile(batch, seq):
    """Largest divisor of `batch` targeting batch_tile*seq >= ~256 MXU rows."""
    target = max(1, -(-256 // seq))          # ceil(256 / seq)
    bt = min(batch, target)
    while batch % bt:
        bt -= 1
    return bt


def _pick_vmem_limit():
    """~75% of the chip's physical VMEM; never claim all of it (v7x = 64 MiB)."""
    cap = None
    try:
        info = pltpu.get_tpu_info()
        cap = getattr(info, "vmem_capacity_bytes", None)
    except Exception:
        cap = None
    if not cap:
        return 48 * 1024 * 1024              # safe default for every generation
    return int(cap) * 3 // 4


def transformer_encoder(x, params, n_heads, batch_tile=None):
    """x: (B, S, W) float32.  params: dict of PyTorch-layout weights."""
    B, S, W = x.shape
    head_size = W // n_heads
    hidden = params["w1"].shape[0]
    bf16 = jnp.bfloat16
    f32 = jnp.float32

    # NOTE: on v7x (2 TensorCores) with small B prefer >=2 grid steps; here we
    # prioritize filling the MXU M dimension for the tiny demo shapes.
    bt = batch_tile if batch_tile is not None else _pick_batch_tile(B, S)
    assert B % bt == 0

    # ---- wrapper-side weight prep (PyTorch (out,in) -> (in,out)) ----
    # Fold attention scale into the query projection: since K == Q,
    # (sQ)(sQ)^T == QQ^T / sqrt(hs) with s = hs**-0.25.
    qscale = head_size ** -0.25
    wqv = jnp.concatenate([(params["wq"] * qscale).T, params["wv"].T],
                          axis=1).astype(bf16)                          # (W, 2W)
    bqv = jnp.concatenate([params["bq"] * qscale, params["bv"]],
                          axis=1).astype(f32)                           # (1, 2W)

    weight_args = (
        wqv, bqv,
        params["wo"].T.astype(bf16), params["bo"].astype(f32),
        params["g1"].astype(f32), params["be1"].astype(f32),
        params["g2"].astype(f32), params["be2"].astype(f32),
        params["w1"].T.astype(bf16), params["b1"].astype(f32),
        params["w2"].T.astype(bf16), params["b2"].astype(f32),
    )

    def weight_spec(shape):
        n = len(shape)
        # Grid-invariant blocks: single-buffer (no need to double-buffer DMAs
        # that never change) to halve resident weight VMEM.
        return pl.BlockSpec(shape, lambda i, n=n: (0,) * n,
                            pipeline_mode=pl.Buffered(1))

    in_specs = [pl.BlockSpec((bt, S, W), lambda i: (i, 0, 0))]
    in_specs += [weight_spec(a.shape) for a in weight_args]

    # Advisory cost estimate for XLA scheduling around the custom call.
    flops = (
        2 * B * S * W * (2 * W)                       # fused Q/V projection
        + 2 * 2 * B * n_heads * S * S * head_size     # scores + att @ V
        + 2 * B * S * W * W                           # output projection
        + 2 * 2 * B * S * W * hidden                  # MLP up + down
    )
    transcendentals = B * n_heads * S * S + B * S * hidden
    bytes_accessed = int(
        2 * x.size * x.dtype.itemsize
        + sum(int(a.size) * a.dtype.itemsize for a in weight_args))
    cost = pl.CostEstimate(flops=int(flops),
                           transcendentals=int(transcendentals),
                           bytes_accessed=bytes_accessed)

    kernel = functools.partial(_transformer_encoder_kernel, n_heads=n_heads)

    return pl.pallas_call(
        kernel,
        out_shape=jax.ShapeDtypeStruct((B, S, W), x.dtype),
        grid=(B // bt,),
        in_specs=in_specs,
        out_specs=pl.BlockSpec((bt, S, W), lambda i: (i, 0, 0)),
        compiler_params=pltpu.CompilerParams(
            dimension_semantics=("parallel",),
            vmem_limit_bytes=_pick_vmem_limit()),
        cost_estimate=cost,
    )(x, *weight_args)


def transformer_encoder_ref(x, params, n_heads):
    """Pure-JAX f32 reference (same semantics, exact GELU) for validation."""
    W = x.shape[-1]
    hs = W // n_heads

    def ln(t, g, b):
        mu = t.mean(-1, keepdims=True)
        var = ((t - mu) ** 2).mean(-1, keepdims=True)
        return (t - mu) / jnp.sqrt(var + 1e-5) * g + b

    h = ln(x, params["g1"], params["be1"])
    q = h @ params["wq"].T + params["bq"]
    v = h @ params["wv"].T + params["bv"]
    outs = []
    for i in range(n_heads):
        qh = q[..., i * hs:(i + 1) * hs]
        vh = v[..., i * hs:(i + 1) * hs]
        att = jnp.einsum("bsh,bth->bst", qh, qh) / math.sqrt(hs)
        att = jax.nn.softmax(att, axis=-1)
        outs.append(jnp.einsum("bst,bth->bsh", att, vh))
    mha = jnp.concatenate(outs, -1) @ params["wo"].T + params["bo"]
    x = x + mha
    h2 = ln(x, params["g2"], params["be2"])
    m = h2 @ params["w1"].T + params["b1"]
    m = 0.5 * m * (1.0 + lax.erf(m / math.sqrt(2.0)))
    return m @ params["w2"].T + params["b2"]


def init_params(key, width, n_heads, r_mlp=4):
    hidden = width * r_mlp
    ks = jax.random.split(key, 8)

    def rnd(k, shape, scale=0.05):
        return (scale * jax.random.normal(k, shape)).astype(jnp.float32)

    return {
        # Per-head query/value Linears stacked along the output dim
        # (head h occupies rows [h*hs, (h+1)*hs) — matches torch.cat over heads).
        "wq": rnd(ks[0], (width, width)), "bq": rnd(ks[1], (1, width)),
        "wv": rnd(ks[2], (width, width)), "bv": rnd(ks[3], (1, width)),
        "wo": rnd(ks[4], (width, width)), "bo": rnd(ks[5], (1, width)),
        "g1": jnp.ones((1, width), jnp.float32),
        "be1": jnp.zeros((1, width), jnp.float32),
        "g2": jnp.ones((1, width), jnp.float32),
        "be2": jnp.zeros((1, width), jnp.float32),
        "w1": rnd(ks[6], (hidden, width)), "b1": jnp.zeros((1, hidden), jnp.float32),
        "w2": rnd(ks[7], (width, hidden)), "b2": jnp.zeros((1, width), jnp.float32),
    }


if __name__ == "__main__":
    # Small but lane-dense shapes: W = 128 (multiple of 128), S multiple of 8.
    B, S, WIDTH, N_HEADS = 2, 16, 128, 4

    key = jax.random.PRNGKey(0)
    k_x, k_p = jax.random.split(key)
    x = jax.random.normal(k_x, (B, S, WIDTH), dtype=jnp.float32)
    params = init_params(k_p, WIDTH, N_HEADS)

    out = jax.block_until_ready(transformer_encoder(x, params, N_HEADS))
    ref = jax.block_until_ready(transformer_encoder_ref(x, params, N_HEADS))

    assert out.shape == (B, S, WIDTH)
    max_err = jnp.max(jnp.abs(out - ref))
    # bf16 matmul operands, approx reciprocal and tanh-GELU => relaxed tolerance.
    assert jnp.allclose(out, ref, rtol=3e-2, atol=3e-2), f"max abs err {max_err}"

    print("KERNEL_OK")
</pallas_src>

<mosaic_0001>
module attributes {stable_mosaic.version = 11 : i64} {
  func.func @_transformer_encoder_kernel(%arg0: i32, %arg1: memref<2x16x128xf32, #tpu.memory_space<vmem>>, %arg2: memref<128x256xbf16, #tpu.memory_space<vmem>>, %arg3: memref<1x256xf32, #tpu.memory_space<vmem>>, %arg4: memref<128x128xbf16, #tpu.memory_space<vmem>>, %arg5: memref<1x128xf32, #tpu.memory_space<vmem>>, %arg6: memref<1x128xf32, #tpu.memory_space<vmem>>, %arg7: memref<1x128xf32, #tpu.memory_space<vmem>>, %arg8: memref<1x128xf32, #tpu.memory_space<vmem>>, %arg9: memref<1x128xf32, #tpu.memory_space<vmem>>, %arg10: memref<128x512xbf16, #tpu.memory_space<vmem>>, %arg11: memref<1x512xf32, #tpu.memory_space<vmem>>, %arg12: memref<512x128xbf16, #tpu.memory_space<vmem>>, %arg13: memref<1x128xf32, #tpu.memory_space<vmem>>, %arg14: memref<2x16x128xf32, #tpu.memory_space<vmem>>) attributes {dimension_semantics = [#tpu.dimension_semantics<parallel>], iteration_bounds = array<i64: 1>, scalar_prefetch = 0 : i64, scratch_operands = 0 : i64, tpu.core_type = #tpu.core_type<tc>, window_params = [{transform_indices = @transform_0, window_bounds = array<i64: 2, 16, 128>}, {pipeline_mode = #tpu.pipeline_mode<synchronous>, transform_indices = @transform_1, window_bounds = array<i64: 128, 256>}, {pipeline_mode = #tpu.pipeline_mode<synchronous>, transform_indices = @transform_2, window_bounds = array<i64: 1, 256>}, {pipeline_mode = #tpu.pipeline_mode<synchronous>, transform_indices = @transform_3, window_bounds = array<i64: 128, 128>}, {pipeline_mode = #tpu.pipeline_mode<synchronous>, transform_indices = @transform_4, window_bounds = array<i64: 1, 128>}, {pipeline_mode = #tpu.pipeline_mode<synchronous>, transform_indices = @transform_5, window_bounds = array<i64: 1, 128>}, {pipeline_mode = #tpu.pipeline_mode<synchronous>, transform_indices = @transform_6, window_bounds = array<i64: 1, 128>}, {pipeline_mode = #tpu.pipeline_mode<synchronous>, transform_indices = @transform_7, window_bounds = array<i64: 1, 128>}, {pipeline_mode = #tpu.pipeline_mode<synchronous>, transform_indices = @transform_8, window_bounds = array<i64: 1, 128>}, {pipeline_mode = #tpu.pipeline_mode<synchronous>, transform_indices = @transform_9, window_bounds = array<i64: 128, 512>}, {pipeline_mode = #tpu.pipeline_mode<synchronous>, transform_indices = @transform_10, window_bounds = array<i64: 1, 512>}, {pipeline_mode = #tpu.pipeline_mode<synchronous>, transform_indices = @transform_11, window_bounds = array<i64: 512, 128>}, {pipeline_mode = #tpu.pipeline_mode<synchronous>, transform_indices = @transform_12, window_bounds = array<i64: 1, 128>}, {transform_indices = @transform_13, window_bounds = array<i64: 2, 16, 128>}]} {
    %c0 = arith.constant 0 : index
    %c0_0 = arith.constant 0 : index
    %c0_1 = arith.constant 0 : index
    %0 = vector.load %arg1[%c0, %c0_0, %c0_1] : memref<2x16x128xf32, #tpu.memory_space<vmem>>, vector<2x16x128xf32>
    %1 = vector.shape_cast %0 : vector<2x16x128xf32> to vector<32x128xf32>
    %c0_2 = arith.constant 0 : index
    %c0_3 = arith.constant 0 : index
    %2 = vector.load %arg6[%c0_2, %c0_3] : memref<1x128xf32, #tpu.memory_space<vmem>>, vector<1x128xf32>
    %c0_4 = arith.constant 0 : index
    %c0_5 = arith.constant 0 : index
    %3 = vector.load %arg7[%c0_4, %c0_5] : memref<1x128xf32, #tpu.memory_space<vmem>>, vector<1x128xf32>
    %cst = arith.constant dense<0.000000e+00> : vector<32xf32>
    %4 = vector.multi_reduction <add>, %1, %cst [1] : vector<32x128xf32> to vector<32xf32>
    %5 = vector.shape_cast %4 : vector<32xf32> to vector<32x1xf32>
    %cst_6 = arith.constant 1.280000e+02 : f32
    %6 = vector.broadcast %cst_6 : f32 to vector<32x1xf32>
    %7 = arith.divf %5, %6 : vector<32x1xf32>
    %8 = vector.broadcast %7 : vector<32x1xf32> to vector<32x128xf32>
    %9 = arith.subf %1, %8 : vector<32x128xf32>
    %10 = arith.mulf %9, %9 : vector<32x128xf32>
    %cst_7 = arith.constant dense<0.000000e+00> : vector<32xf32>
    %11 = vector.multi_reduction <add>, %10, %cst_7 [1] : vector<32x128xf32> to vector<32xf32>
    %12 = vector.shape_cast %11 : vector<32xf32> to vector<32x1xf32>
    %cst_8 = arith.constant 1.280000e+02 : f32
    %13 = vector.broadcast %cst_8 : f32 to vector<32x1xf32>
    %14 = arith.divf %12, %13 : vector<32x1xf32>
    %15 = vector.broadcast %7 : vector<32x1xf32> to vector<32x128xf32>
    %16 = arith.subf %1, %15 : vector<32x128xf32>
    %cst_9 = arith.constant 9.99999974E-6 : f32
    %17 = vector.broadcast %cst_9 : f32 to vector<32x1xf32>
    %18 = arith.addf %14, %17 : vector<32x1xf32>
    %19 = math.rsqrt %18 : vector<32x1xf32>
    %20 = vector.broadcast %19 : vector<32x1xf32> to vector<32x128xf32>
    %21 = arith.mulf %16, %20 : vector<32x128xf32>
    %22 = vector.broadcast %2 : vector<1x128xf32> to vector<32x128xf32>
    %23 = arith.mulf %21, %22 : vector<32x128xf32>
    %24 = vector.broadcast %3 : vector<1x128xf32> to vector<32x128xf32>
    %25 = arith.addf %23, %24 : vector<32x128xf32>
    %26 = arith.truncf %25 : vector<32x128xf32> to vector<32x128xbf16>
    %c0_10 = arith.constant 0 : index
    %c0_11 = arith.constant 0 : index
    %27 = vector.load %arg2[%c0_10, %c0_11] : memref<128x256xbf16, #tpu.memory_space<vmem>>, vector<128x256xbf16>
    %cst_12 = arith.constant dense<0.000000e+00> : vector<32x256xf32>
    %28 = tpu.matmul %26, %27, %cst_12 {dimension_numbers = #tpu.dot_dimension_numbers<[1], [0], [0], [1], [0, 0, 1, 1], [], []>} : vector<32x128xbf16>, vector<128x256xbf16>, vector<32x256xf32> -> vector<32x256xf32>
    %c0_13 = arith.constant 0 : index
    %c0_14 = arith.constant 0 : index
    %29 = vector.load %arg3[%c0_13, %c0_14] : memref<1x256xf32, #tpu.memory_space<vmem>>, vector<1x256xf32>
    %30 = vector.broadcast %29 : vector<1x256xf32> to vector<32x256xf32>
    %31 = arith.addf %28, %30 : vector<32x256xf32>
    %32 = arith.truncf %31 : vector<32x256xf32> to vector<32x256xbf16>
    %33 = vector.extract_strided_slice %32 {offsets = [0, 0], sizes = [16, 32], strides = [1, 1]} : vector<32x256xbf16> to vector<16x32xbf16>
    %34 = vector.extract_strided_slice %32 {offsets = [0, 128], sizes = [16, 32], strides = [1, 1]} : vector<32x256xbf16> to vector<16x32xbf16>
    %35 = vector.extract_strided_slice %32 {offsets = [0, 32], sizes = [16, 32], strides = [1, 1]} : vector<32x256xbf16> to vector<16x32xbf16>
    %36 = vector.extract_strided_slice %32 {offsets = [0, 160], sizes = [16, 32], strides = [1, 1]} : vector<32x256xbf16> to vector<16x32xbf16>
    %37 = vector.extract_strided_slice %32 {offsets = [0, 64], sizes = [16, 32], strides = [1, 1]} : vector<32x256xbf16> to vector<16x32xbf16>
    %38 = vector.extract_strided_slice %32 {offsets = [0, 192], sizes = [16, 32], strides = [1, 1]} : vector<32x256xbf16> to vector<16x32xbf16>
    %39 = vector.extract_strided_slice %32 {offsets = [0, 96], sizes = [16, 32], strides = [1, 1]} : vector<32x256xbf16> to vector<16x32xbf16>
    %40 = vector.extract_strided_slice %32 {offsets = [0, 224], sizes = [16, 32], strides = [1, 1]} : vector<32x256xbf16> to vector<16x32xbf16>
    %41 = vector.extract_strided_slice %32 {offsets = [16, 0], sizes = [16, 32], strides = [1, 1]} : vector<32x256xbf16> to vector<16x32xbf16>
    %42 = vector.extract_strided_slice %32 {offsets = [16, 128], sizes = [16, 32], strides = [1, 1]} : vector<32x256xbf16> to vector<16x32xbf16>
    %43 = vector.extract_strided_slice %32 {offsets = [16, 32], sizes = [16, 32], strides = [1, 1]} : vector<32x256xbf16> to vector<16x32xbf16>
    %44 = vector.extract_strided_slice %32 {offsets = [16, 160], sizes = [16, 32], strides = [1, 1]} : vector<32x256xbf16> to vector<16x32xbf16>
    %45 = vector.extract_strided_slice %32 {offsets = [16, 64], sizes = [16, 32], strides = [1, 1]} : vector<32x256xbf16> to vector<16x32xbf16>
    %46 = vector.extract_strided_slice %32 {offsets = [16, 192], sizes = [16, 32], strides = [1, 1]} : vector<32x256xbf16> to vector<16x32xbf16>
    %47 = vector.extract_strided_slice %32 {offsets = [16, 96], sizes = [16, 32], strides = [1, 1]} : vector<32x256xbf16> to vector<16x32xbf16>
    %48 = vector.extract_strided_slice %32 {offsets = [16, 224], sizes = [16, 32], strides = [1, 1]} : vector<32x256xbf16> to vector<16x32xbf16>
    %49 = vector.shape_cast %33 : vector<16x32xbf16> to vector<1x16x32xbf16>
    %50 = vector.shape_cast %35 : vector<16x32xbf16> to vector<1x16x32xbf16>
    %51 = vector.shape_cast %37 : vector<16x32xbf16> to vector<1x16x32xbf16>
    %52 = vector.shape_cast %39 : vector<16x32xbf16> to vector<1x16x32xbf16>
    %53 = vector.shape_cast %41 : vector<16x32xbf16> to vector<1x16x32xbf16>
    %54 = vector.shape_cast %43 : vector<16x32xbf16> to vector<1x16x32xbf16>
    %55 = vector.shape_cast %45 : vector<16x32xbf16> to vector<1x16x32xbf16>
    %56 = vector.shape_cast %47 : vector<16x32xbf16> to vector<1x16x32xbf16>
    %57 = tpu.concatenate %49, %50, %51, %52, %53, %54, %55, %56 in 0 : vector<1x16x32xbf16>, vector<1x16x32xbf16>, vector<1x16x32xbf16>, vector<1x16x32xbf16>, vector<1x16x32xbf16>, vector<1x16x32xbf16>, vector<1x16x32xbf16>, vector<1x16x32xbf16> -> vector<8x16x32xbf16>
    %58 = vector.shape_cast %34 : vector<16x32xbf16> to vector<1x16x32xbf16>
    %59 = vector.shape_cast %36 : vector<16x32xbf16> to vector<1x16x32xbf16>
    %60 = vector.shape_cast %38 : vector<16x32xbf16> to vector<1x16x32xbf16>
    %61 = vector.shape_cast %40 : vector<16x32xbf16> to vector<1x16x32xbf16>
    %62 = vector.shape_cast %42 : vector<16x32xbf16> to vector<1x16x32xbf16>
    %63 = vector.shape_cast %44 : vector<16x32xbf16> to vector<1x16x32xbf16>
    %64 = vector.shape_cast %46 : vector<16x32xbf16> to vector<1x16x32xbf16>
    %65 = vector.shape_cast %48 : vector<16x32xbf16> to vector<1x16x32xbf16>
    %66 = tpu.concatenate %58, %59, %60, %61, %62, %63, %64, %65 in 0 : vector<1x16x32xbf16>, vector<1x16x32xbf16>, vector<1x16x32xbf16>, vector<1x16x32xbf16>, vector<1x16x32xbf16>, vector<1x16x32xbf16>, vector<1x16x32xbf16>, vector<1x16x32xbf16> -> vector<8x16x32xbf16>
    %cst_15 = arith.constant dense<0.000000e+00> : vector<8x16x16xf32>
    %67 = tpu.matmul %57, %57, %cst_15 {dimension_numbers = #tpu.dot_dimension_numbers<[2], [2], [1], [1], [0, 0, 0, 1, 1, 1], [0], [0]>} : vector<8x16x32xbf16>, vector<8x16x32xbf16>, vector<8x16x16xf32> -> vector<8x16x16xf32>
    %cst_16 = arith.constant dense<0xFF800000> : vector<8x16xf32>
    %68 = vector.multi_reduction <maximumf>, %67, %cst_16 [2] : vector<8x16x16xf32> to vector<8x16xf32>
    %69 = vector.shape_cast %68 : vector<8x16xf32> to vector<8x16x1xf32>
    %70 = vector.broadcast %69 : vector<8x16x1xf32> to vector<8x16x16xf32>
    %71 = arith.subf %67, %70 : vector<8x16x16xf32>
    %72 = math.exp %71 : vector<8x16x16xf32>
    %cst_17 = arith.constant dense<0.000000e+00> : vector<8x16xf32>
    %73 = vector.multi_reduction <add>, %72, %cst_17 [2] : vector<8x16x16xf32> to vector<8x16xf32>
    %74 = vector.shape_cast %73 : vector<8x16xf32> to vector<8x16x1xf32>
    %75 = tpu.reciprocal %74 {approx = true} : vector<8x16x1xf32> -> vector<8x16x1xf32>
    %76 = vector.broadcast %75 : vector<8x16x1xf32> to vector<8x16x16xf32>
    %77 = arith.mulf %72, %76 : vector<8x16x16xf32>
    %78 = arith.truncf %77 : vector<8x16x16xf32> to vector<8x16x16xbf16>
    %cst_18 = arith.constant dense<0.000000e+00> : vector<8x16x32xf32>
    %79 = tpu.matmul %78, %66, %cst_18 {dimension_numbers = #tpu.dot_dimension_numbers<[2], [1], [1], [2], [0, 0, 0, 1, 1, 2], [0], [0]>} : vector<8x16x16xbf16>, vector<8x16x32xbf16>, vector<8x16x32xf32> -> vector<8x16x32xf32>
    %80 = arith.truncf %79 : vector<8x16x32xf32> to vector<8x16x32xbf16>
    %81 = vector.extract_strided_slice %80 {offsets = [0, 0, 0], sizes = [1, 16, 32], strides = [1, 1, 1]} : vector<8x16x32xbf16> to vector<1x16x32xbf16>
    %82 = vector.shape_cast %81 : vector<1x16x32xbf16> to vector<16x32xbf16>
    %83 = vector.extract_strided_slice %80 {offsets = [1, 0, 0], sizes = [1, 16, 32], strides = [1, 1, 1]} : vector<8x16x32xbf16> to vector<1x16x32xbf16>
    %84 = vector.shape_cast %83 : vector<1x16x32xbf16> to vector<16x32xbf16>
    %85 = vector.extract_strided_slice %80 {offsets = [2, 0, 0], sizes = [1, 16, 32], strides = [1, 1, 1]} : vector<8x16x32xbf16> to vector<1x16x32xbf16>
    %86 = vector.shape_cast %85 : vector<1x16x32xbf16> to vector<16x32xbf16>
    %87 = vector.extract_strided_slice %80 {offsets = [3, 0, 0], sizes = [1, 16, 32], strides = [1, 1, 1]} : vector<8x16x32xbf16> to vector<1x16x32xbf16>
    %88 = vector.shape_cast %87 : vector<1x16x32xbf16> to vector<16x32xbf16>
    %89 = tpu.concatenate %82, %84, %86, %88 in 1 : vector<16x32xbf16>, vector<16x32xbf16>, vector<16x32xbf16>, vector<16x32xbf16> -> vector<16x128xbf16>
    %90 = vector.extract_strided_slice %80 {offsets = [4, 0, 0], sizes = [1, 16, 32], strides = [1, 1, 1]} : vector<8x16x32xbf16> to vector<1x16x32xbf16>
    %91 = vector.shape_cast %90 : vector<1x16x32xbf16> to vector<16x32xbf16>
    %92 = vector.extract_strided_slice %80 {offsets = [5, 0, 0], sizes = [1, 16, 32], strides = [1, 1, 1]} : vector<8x16x32xbf16> to vector<1x16x32xbf16>
    %93 = vector.shape_cast %92 : vector<1x16x32xbf16> to vector<16x32xbf16>
    %94 = vector.extract_strided_slice %80 {offsets = [6, 0, 0], sizes = [1, 16, 32], strides = [1, 1, 1]} : vector<8x16x32xbf16> to vector<1x16x32xbf16>
    %95 = vector.shape_cast %94 : vector<1x16x32xbf16> to vector<16x32xbf16>
    %96 = vector.extract_strided_slice %80 {offsets = [7, 0, 0], sizes = [1, 16, 32], strides = [1, 1, 1]} : vector<8x16x32xbf16> to vector<1x16x32xbf16>
    %97 = vector.shape_cast %96 : vector<1x16x32xbf16> to vector<16x32xbf16>
    %98 = tpu.concatenate %91, %93, %95, %97 in 1 : vector<16x32xbf16>, vector<16x32xbf16>, vector<16x32xbf16>, vector<16x32xbf16> -> vector<16x128xbf16>
    %99 = tpu.concatenate %89, %98 in 0 : vector<16x128xbf16>, vector<16x128xbf16> -> vector<32x128xbf16>
    %c0_19 = arith.constant 0 : index
    %c0_20 = arith.constant 0 : index
    %100 = vector.load %arg4[%c0_19, %c0_20] : memref<128x128xbf16, #tpu.memory_space<vmem>>, vector<128x128xbf16>
    %cst_21 = arith.constant dense<0.000000e+00> : vector<32x128xf32>
    %101 = tpu.matmul %99, %100, %cst_21 {dimension_numbers = #tpu.dot_dimension_numbers<[1], [0], [0], [1], [0, 0, 1, 1], [], []>} : vector<32x128xbf16>, vector<128x128xbf16>, vector<32x128xf32> -> vector<32x128xf32>
    %c0_22 = arith.constant 0 : index
    %c0_23 = arith.constant 0 : index
    %102 = vector.load %arg5[%c0_22, %c0_23] : memref<1x128xf32, #tpu.memory_space<vmem>>, vector<1x128xf32>
    %103 = vector.broadcast %102 : vector<1x128xf32> to vector<32x128xf32>
    %104 = arith.addf %101, %103 : vector<32x128xf32>
    %105 = arith.addf %1, %104 : vector<32x128xf32>
    %c0_24 = arith.constant 0 : index
    %c0_25 = arith.constant 0 : index
    %106 = vector.load %arg8[%c0_24, %c0_25] : memref<1x128xf32, #tpu.memory_space<vmem>>, vector<1x128xf32>
    %c0_26 = arith.constant 0 : index
    %c0_27 = arith.constant 0 : index
    %107 = vector.load %arg9[%c0_26, %c0_27] : memref<1x128xf32, #tpu.memory_space<vmem>>, vector<1x128xf32>
    %cst_28 = arith.constant dense<0.000000e+00> : vector<32xf32>
    %108 = vector.multi_reduction <add>, %105, %cst_28 [1] : vector<32x128xf32> to vector<32xf32>
    %109 = vector.shape_cast %108 : vector<32xf32> to vector<32x1xf32>
    %cst_29 = arith.constant 1.280000e+02 : f32
    %110 = vector.broadcast %cst_29 : f32 to vector<32x1xf32>
    %111 = arith.divf %109, %110 : vector<32x1xf32>
    %112 = vector.broadcast %111 : vector<32x1xf32> to vector<32x128xf32>
    %113 = arith.subf %105, %112 : vector<32x128xf32>
    %114 = arith.mulf %113, %113 : vector<32x128xf32>
    %cst_30 = arith.constant dense<0.000000e+00> : vector<32xf32>
    %115 = vector.multi_reduction <add>, %114, %cst_30 [1] : vector<32x128xf32> to vector<32xf32>
    %116 = vector.shape_cast %115 : vector<32xf32> to vector<32x1xf32>
    %cst_31 = arith.constant 1.280000e+02 : f32
    %117 = vector.broadcast %cst_31 : f32 to vector<32x1xf32>
    %118 = arith.divf %116, %117 : vector<32x1xf32>
    %119 = vector.broadcast %111 : vector<32x1xf32> to vector<32x128xf32>
    %120 = arith.subf %105, %119 : vector<32x128xf32>
    %cst_32 = arith.constant 9.99999974E-6 : f32
    %121 = vector.broadcast %cst_32 : f32 to vector<32x1xf32>
    %122 = arith.addf %118, %121 : vector<32x1xf32>
    %123 = math.rsqrt %122 : vector<32x1xf32>
    %124 = vector.broadcast %123 : vector<32x1xf32> to vector<32x128xf32>
    %125 = arith.mulf %120, %124 : vector<32x128xf32>
    %126 = vector.broadcast %106 : vector<1x128xf32> to vector<32x128xf32>
    %127 = arith.mulf %125, %126 : vector<32x128xf32>
    %128 = vector.broadcast %107 : vector<1x128xf32> to vector<32x128xf32>
    %129 = arith.addf %127, %128 : vector<32x128xf32>
    %130 = arith.truncf %129 : vector<32x128xf32> to vector<32x128xbf16>
    %c0_33 = arith.constant 0 : index
    %c0_34 = arith.constant 0 : index
    %131 = vector.load %arg10[%c0_33, %c0_34] : memref<128x512xbf16, #tpu.memory_space<vmem>>, vector<128x512xbf16>
    %cst_35 = arith.constant dense<0.000000e+00> : vector<32x512xf32>
    %132 = tpu.matmul %130, %131, %cst_35 {dimension_numbers = #tpu.dot_dimension_numbers<[1], [0], [0], [1], [0, 0, 1, 1], [], []>} : vector<32x128xbf16>, vector<128x512xbf16>, vector<32x512xf32> -> vector<32x512xf32>
    %c0_36 = arith.constant 0 : index
    %c0_37 = arith.constant 0 : index
    %133 = vector.load %arg11[%c0_36, %c0_37] : memref<1x512xf32, #tpu.memory_space<vmem>>, vector<1x512xf32>
    %134 = vector.broadcast %133 : vector<1x512xf32> to vector<32x512xf32>
    %135 = arith.addf %132, %134 : vector<32x512xf32>
    %cst_38 = arith.constant 5.000000e-01 : f32
    %136 = vector.broadcast %cst_38 : f32 to vector<32x512xf32>
    %137 = arith.mulf %136, %135 : vector<32x512xf32>
    %138 = arith.mulf %135, %135 : vector<32x512xf32>
    %139 = arith.mulf %138, %135 : vector<32x512xf32>
    %cst_39 = arith.constant 4.471500e-02 : f32
    %140 = vector.broadcast %cst_39 : f32 to vector<32x512xf32>
    %141 = arith.mulf %140, %139 : vector<32x512xf32>
    %142 = arith.addf %135, %141 : vector<32x512xf32>
    %cst_40 = arith.constant 0.797884583 : f32
    %143 = vector.broadcast %cst_40 : f32 to vector<32x512xf32>
    %144 = arith.mulf %143, %142 : vector<32x512xf32>
    %145 = math.tanh %144 : vector<32x512xf32>
    %cst_41 = arith.constant 1.000000e+00 : f32
    %146 = vector.broadcast %cst_41 : f32 to vector<32x512xf32>
    %147 = arith.addf %146, %145 : vector<32x512xf32>
    %148 = arith.mulf %137, %147 : vector<32x512xf32>
    %149 = arith.truncf %148 : vector<32x512xf32> to vector<32x512xbf16>
    %c0_42 = arith.constant 0 : index
    %c0_43 = arith.constant 0 : index
    %150 = vector.load %arg12[%c0_42, %c0_43] : memref<512x128xbf16, #tpu.memory_space<vmem>>, vector<512x128xbf16>
    %cst_44 = arith.constant dense<0.000000e+00> : vector<32x128xf32>
    %151 = tpu.matmul %149, %150, %cst_44 {dimension_numbers = #tpu.dot_dimension_numbers<[1], [0], [0], [1], [0, 0, 1, 1], [], []>} : vector<32x512xbf16>, vector<512x128xbf16>, vector<32x128xf32> -> vector<32x128xf32>
    %c0_45 = arith.constant 0 : index
    %c0_46 = arith.constant 0 : index
    %152 = vector.load %arg13[%c0_45, %c0_46] : memref<1x128xf32, #tpu.memory_space<vmem>>, vector<1x128xf32>
    %153 = vector.broadcast %152 : vector<1x128xf32> to vector<32x128xf32>
    %154 = arith.addf %151, %153 : vector<32x128xf32>
    %155 = vector.shape_cast %154 : vector<32x128xf32> to vector<2x16x128xf32>
    %c0_47 = arith.constant 0 : index
    %c0_48 = arith.constant 0 : index
    %c0_49 = arith.constant 0 : index
    %156 = vector.load %arg14[%c0_47, %c0_48, %c0_49] : memref<2x16x128xf32, #tpu.memory_space<vmem>>, vector<2x16x128xf32>
    tpu.vector_store %arg14[%c0_47, %c0_48, %c0_49], %155 {strides = array<i32>} : memref<2x16x128xf32, #tpu.memory_space<vmem>>, vector<2x16x128xf32>,
    return
  }
  func.func @transform_0(%arg0: i32) -> (i32, i32, i32) {
    %c0_i32 = arith.constant 0 : i32
    %c0_i32_0 = arith.constant 0 : i32
    %c0_i32_1 = arith.constant 0 : i32
    return %arg0, %c0_i32, %c0_i32_0 : i32, i32, i32
  }
  func.func @transform_1(%arg0: i32) -> (i32, i32) {
    %c0_i32 = arith.constant 0 : i32
    %c0_i32_0 = arith.constant 0 : i32
    %c0_i32_1 = arith.constant 0 : i32
    return %c0_i32, %c0_i32_0 : i32, i32
  }
  func.func @transform_2(%arg0: i32) -> (i32, i32) {
    %c0_i32 = arith.constant 0 : i32
    %c0_i32_0 = arith.constant 0 : i32
    %c0_i32_1 = arith.constant 0 : i32
    return %c0_i32, %c0_i32_0 : i32, i32
  }
  func.func @transform_3(%arg0: i32) -> (i32, i32) {
    %c0_i32 = arith.constant 0 : i32
    %c0_i32_0 = arith.constant 0 : i32
    %c0_i32_1 = arith.constant 0 : i32
    return %c0_i32, %c0_i32_0 : i32, i32
  }
  func.func @transform_4(%arg0: i32) -> (i32, i32) {
    %c0_i32 = arith.constant 0 : i32
    %c0_i32_0 = arith.constant 0 : i32
    %c0_i32_1 = arith.constant 0 : i32
    return %c0_i32, %c0_i32_0 : i32, i32
  }
  func.func @transform_5(%arg0: i32) -> (i32, i32) {
    %c0_i32 = arith.constant 0 : i32
    %c0_i32_0 = arith.constant 0 : i32
    %c0_i32_1 = arith.constant 0 : i32
    return %c0_i32, %c0_i32_0 : i32, i32
  }
  func.func @transform_6(%arg0: i32) -> (i32, i32) {
    %c0_i32 = arith.constant 0 : i32
    %c0_i32_0 = arith.constant 0 : i32
    %c0_i32_1 = arith.constant 0 : i32
    return %c0_i32, %c0_i32_0 : i32, i32
  }
  func.func @transform_7(%arg0: i32) -> (i32, i32) {
    %c0_i32 = arith.constant 0 : i32
    %c0_i32_0 = arith.constant 0 : i32
    %c0_i32_1 = arith.constant 0 : i32
    return %c0_i32, %c0_i32_0 : i32, i32
  }
  func.func @transform_8(%arg0: i32) -> (i32, i32) {
    %c0_i32 = arith.constant 0 : i32
    %c0_i32_0 = arith.constant 0 : i32
    %c0_i32_1 = arith.constant 0 : i32
    return %c0_i32, %c0_i32_0 : i32, i32
  }
  func.func @transform_9(%arg0: i32) -> (i32, i32) {
    %c0_i32 = arith.constant 0 : i32
    %c0_i32_0 = arith.constant 0 : i32
    %c0_i32_1 = arith.constant 0 : i32
    return %c0_i32, %c0_i32_0 : i32, i32
  }
  func.func @transform_10(%arg0: i32) -> (i32, i32) {
    %c0_i32 = arith.constant 0 : i32
    %c0_i32_0 = arith.constant 0 : i32
    %c0_i32_1 = arith.constant 0 : i32
    return %c0_i32, %c0_i32_0 : i32, i32
  }
  func.func @transform_11(%arg0: i32) -> (i32, i32) {
    %c0_i32 = arith.constant 0 : i32
    %c0_i32_0 = arith.constant 0 : i32
    %c0_i32_1 = arith.constant 0 : i32
    return %c0_i32, %c0_i32_0 : i32, i32
  }
  func.func @transform_12(%arg0: i32) -> (i32, i32) {
    %c0_i32 = arith.constant 0 : i32
    %c0_i32_0 = arith.constant 0 : i32
    %c0_i32_1 = arith.constant 0 : i32
    return %c0_i32, %c0_i32_0 : i32, i32
  }
  func.func @transform_13(%arg0: i32) -> (i32, i32, i32) {
    %c0_i32 = arith.constant 0 : i32
    %c0_i32_0 = arith.constant 0 : i32
    %c0_i32_1 = arith.constant 0 : i32
    return %arg0, %c0_i32, %c0_i32_0 : i32, i32, i32
  }
}

</mosaic_0001>

<llo_original>
// kernel: tpu_custom_call.1
$region0: #{tpu_custom_call.1}
  #allocation0 [shape = 'u32[]', space=smem, size = 0x4, offset = 0x4, fixed_abs, tag = 'smem constant byte address 0x4 - core index']
  #allocation1 [shape = 'u32[144,128]{1,0:T(1,128)}', space=vmem, size = 0x12000, scoped, tag = 'internal scratch']
  %s0 = inlined_call_operand.hbm [shape: f32[2,16,128], index: 0, kind: input, shape index: {}]
  %s1 = inlined_call_operand.hbm [shape: bf16[128,256], index: 1, kind: input, shape index: {}]
  %s2 = inlined_call_operand.vmem [shape: f32[1,256], index: 2, kind: input, shape index: {}]
  %s3 = inlined_call_operand.hbm [shape: bf16[128,128], index: 3, kind: input, shape index: {}]
  %s4 = inlined_call_operand.vmem [shape: f32[1,128], index: 4, kind: input, shape index: {}]
  %s5 = inlined_call_operand.vmem [shape: f32[1,128], index: 5, kind: input, shape index: {}]
  %s6 = inlined_call_operand.vmem [shape: f32[1,128], index: 6, kind: input, shape index: {}]
  %s7 = inlined_call_operand.vmem [shape: f32[1,128], index: 7, kind: input, shape index: {}]
  %s8 = inlined_call_operand.vmem [shape: f32[1,128], index: 8, kind: input, shape index: {}]
  %s9 = inlined_call_operand.hbm [shape: bf16[128,512], index: 9, kind: input, shape index: {}]
  %s10 = inlined_call_operand.vmem [shape: f32[1,512], index: 10, kind: input, shape index: {}]
  %s11 = inlined_call_operand.hbm [shape: bf16[512,128], index: 11, kind: input, shape index: {}]
  %s12 = inlined_call_operand.vmem [shape: f32[1,128], index: 12, kind: input, shape index: {}]
  %s13 = inlined_call_operand.hbm [shape: f32[2,16,128], index: 13, kind: output, shape index: {}]
  %s14 = sld [smem:[#allocation0]]
  $region82: #{tpu_custom_call.1} parent=0
    _
  %s16 = ssub.s32 1, %s14
  %s17 = scalar_select 0, %s16, %s14
  $region1: #{tpu_custom_call.1} parent=0
    #allocation2 [shape = 'u8[16384]{0}', space=vmem, size = 0x4000, scoped, tag = 'input window, operand 0, single buffered']
    #allocation3 [shape = 's32[1]{0}', space=sflag, size = 0x4, scoped, tag = 'scoped memory for tpu_custom_call.1']
    #allocation4 [shape = 's32[1]{0}', space=sflag, size = 0x4, scoped, tag = 'scoped memory for tpu_custom_call.1']
    #allocation5 [shape = 'u8[65536]{0}', space=vmem, size = 0x10000, scoped, tag = 'input window, operand 1, single buffered']
    #allocation6 [shape = 's32[1]{0}', space=sflag, size = 0x4, scoped, tag = 'scoped memory for tpu_custom_call.1']
    #allocation7 [shape = 'u8[32768]{0}', space=vmem, size = 0x8000, scoped, tag = 'input window, operand 3, single buffered']
    #allocation8 [shape = 'u8[131072]{0}', space=vmem, size = 0x20000, scoped, tag = 'input window, operand 9, single buffered']
    #allocation9 [shape = 's32[1]{0}', space=sflag, size = 0x4, scoped, tag = 'scoped memory for tpu_custom_call.1']
    #allocation10 [shape = 'u8[131072]{0}', space=vmem, size = 0x20000, scoped, tag = 'input window, operand 11, single buffered']
    #allocation11 [shape = 'u8[16384]{0}', space=vmem, size = 0x4000, scoped, tag = 'output window, operand 0, single buffered']
    %18 = vsyncpa [#allocation3], 0
    %19 = vsyncpa [#allocation6], 0
    %20 = vsyncpa [#allocation9], 0
    %21 = vsyncpa [#allocation4], 0
    // Predicated region
    $region2: #{tpu_custom_call.1} parent=1 // pred_check
      _
    $region3: #{tpu_custom_call.1} parent=1 // pred_check_branch
      %23 = sbr.rel (0) target = $region5
    $region4: #{tpu_custom_call.1} parent=1 // pred_region
      %s25 = ssub.s32 512, 512
      %26 = vsyncadd [#allocation3], %s25
      %s27 = sshll.u32 [#allocation2], 4
      %s28 = int_to_ptr.vmem [resolvable:$true] %s27
      %33 = dma.hbm_to_vmem [thread:$0]  %s0, 512, %s28, [#allocation3], 128, 128, 8
    $region5: #{tpu_custom_call.1} parent=1 // pred_fallthru
      _
    // Predicated region
    $region6: #{tpu_custom_call.1} parent=1 // pred_check
      _
    $region7: #{tpu_custom_call.1} parent=1 // pred_check_branch
      %35 = sbr.rel (0) target = $region9
    $region8: #{tpu_custom_call.1} parent=1 // pred_region
      %s37 = ssub.s32 2048, 2048
      %38 = vsyncadd [#allocation6], %s37
      %s39 = sshll.u32 [#allocation5], 4
      %s40 = int_to_ptr.vmem [resolvable:$true] %s39
      %45 = dma.hbm_to_vmem [thread:$0]  %s1, 2048, %s40, [#allocation6], 128, 128, 8
    $region9: #{tpu_custom_call.1} parent=1 // pred_fallthru
      _
    // Predicated region
    $region10: #{tpu_custom_call.1} parent=1 // pred_check
      _
    $region11: #{tpu_custom_call.1} parent=1 // pred_check_branch
      %47 = sbr.rel (0) target = $region13
    $region12: #{tpu_custom_call.1} parent=1 // pred_region
      _
    $region13: #{tpu_custom_call.1} parent=1 // pred_fallthru
      _
    // Predicated region
    $region14: #{tpu_custom_call.1} parent=1 // pred_check
      _
    $region15: #{tpu_custom_call.1} parent=1 // pred_check_branch
      %49 = sbr.rel (0) target = $region17
    $region16: #{tpu_custom_call.1} parent=1 // pred_region
      %s51 = ssub.s32 1024, 1024
      %52 = vsyncadd [#allocation6], %s51
      %s53 = sshll.u32 [#allocation7], 4
      %s54 = int_to_ptr.vmem [resolvable:$true] %s53
      %59 = dma.hbm_to_vmem [thread:$0]  %s3, 1024, %s54, [#allocation6], 64, 64, 4
    $region17: #{tpu_custom_call.1} parent=1 // pred_fallthru
      _
    // Predicated region
    $region18: #{tpu_custom_call.1} parent=1 // pred_check
      _
    $region19: #{tpu_custom_call.1} parent=1 // pred_check_branch
      %61 = sbr.rel (0) target = $region21
    $region20: #{tpu_custom_call.1} parent=1 // pred_region
      _
    $region21: #{tpu_custom_call.1} parent=1 // pred_fallthru
      _
    // Predicated region
    $region22: #{tpu_custom_call.1} parent=1 // pred_check
      _
    $region23: #{tpu_custom_call.1} parent=1 // pred_check_branch
      %63 = sbr.rel (0) target = $region25
    $region24: #{tpu_custom_call.1} parent=1 // pred_region
      _
    $region25: #{tpu_custom_call.1} parent=1 // pred_fallthru
      _
    // Predicated region
    $region26: #{tpu_custom_call.1} parent=1 // pred_check
      _
    $region27: #{tpu_custom_call.1} parent=1 // pred_check_branch
      %65 = sbr.rel (0) target = $region29
    $region28: #{tpu_custom_call.1} parent=1 // pred_region
      _
    $region29: #{tpu_custom_call.1} parent=1 // pred_fallthru
      _
    // Predicated region
    $region30: #{tpu_custom_call.1} parent=1 // pred_check
      _
    $region31: #{tpu_custom_call.1} parent=1 // pred_check_branch
      %67 = sbr.rel (0) target = $region33
    $region32: #{tpu_custom_call.1} parent=1 // pred_region
      _
    $region33: #{tpu_custom_call.1} parent=1 // pred_fallthru
      _
    // Predicated region
    $region34: #{tpu_custom_call.1} parent=1 // pred_check
      _
    $region35: #{tpu_custom_call.1} parent=1 // pred_check_branch
      %69 = sbr.rel (0) target = $region37
    $region36: #{tpu_custom_call.1} parent=1 // pred_region
      _
    $region37: #{tpu_custom_call.1} parent=1 // pred_fallthru
      _
    // Predicated region
    $region38: #{tpu_custom_call.1} parent=1 // pred_check
      _
    $region39: #{tpu_custom_call.1} parent=1 // pred_check_branch
      %71 = sbr.rel (0) target = $region41
    $region40: #{tpu_custom_call.1} parent=1 // pred_region
      %s73 = ssub.s32 4096, 4096
      %74 = vsyncadd [#allocation9], %s73
      %s75 = sshll.u32 [#allocation8], 4
      %s76 = int_to_ptr.vmem [resolvable:$true] %s75
      %81 = dma.hbm_to_vmem [thread:$0]  %s9, 4096, %s76, [#allocation9], 256, 256, 16
    $region41: #{tpu_custom_call.1} parent=1 // pred_fallthru
      _
    // Predicated region
    $region42: #{tpu_custom_call.1} parent=1 // pred_check
      _
    $region43: #{tpu_custom_call.1} parent=1 // pred_check_branch
      %83 = sbr.rel (0) target = $region45
    $region44: #{tpu_custom_call.1} parent=1 // pred_region
      _
    $region45: #{tpu_custom_call.1} parent=1 // pred_fallthru
      _
    // Predicated region
    $region46: #{tpu_custom_call.1} parent=1 // pred_check
      _
    $region47: #{tpu_custom_call.1} parent=1 // pred_check_branch
      %85 = sbr.rel (0) target = $region49
    $region48: #{tpu_custom_call.1} parent=1 // pred_region
      %s87 = ssub.s32 4096, 4096
      %88 = vsyncadd [#allocation9], %s87
      %s89 = sshll.u32 [#allocation10], 4
      %s90 = int_to_ptr.vmem [resolvable:$true] %s89
      %95 = dma.hbm_to_vmem [thread:$0]  %s11, 4096, %s90, [#allocation9], 64, 64, 4
    $region49: #{tpu_custom_call.1} parent=1 // pred_fallthru
      _
    // Predicated region
    $region50: #{tpu_custom_call.1} parent=1 // pred_check
      _
    $region51: #{tpu_custom_call.1} parent=1 // pred_check_branch
      %97 = sbr.rel (0) target = $region53
    $region52: #{tpu_custom_call.1} parent=1 // pred_region
      _
    $region53: #{tpu_custom_call.1} parent=1 // pred_fallthru
      _
    // Predicated region
    $region54: #{tpu_custom_call.1} parent=1 // pred_check
      _
    $region55: #{tpu_custom_call.1} parent=1 // pred_check_branch
      %99 = sbr.rel (0) target = $region57
    $region56: #{tpu_custom_call.1} parent=1 // pred_region
      %100 = dma.done [#allocation3], 512
    $region57: #{tpu_custom_call.1} parent=1 // pred_fallthru
      _
    // Predicated region
    $region58: #{tpu_custom_call.1} parent=1 // pred_check
      _
    $region59: #{tpu_custom_call.1} parent=1 // pred_check_branch
      %102 = sbr.rel (0) target = $region61
    $region60: #{tpu_custom_call.1} parent=1 // pred_region
      %103 = dma.done [#allocation6], 2048
    $region61: #{tpu_custom_call.1} parent=1 // pred_fallthru
      _
    // Predicated region
    $region62: #{tpu_custom_call.1} parent=1 // pred_check
      _
    $region63: #{tpu_custom_call.1} parent=1 // pred_check_branch
      %105 = sbr.rel (0) target = $region65
    $region64: #{tpu_custom_call.1} parent=1 // pred_region
      %106 = dma.done [#allocation6], 1024
    $region65: #{tpu_custom_call.1} parent=1 // pred_fallthru
      _
    // Predicated region
    $region66: #{tpu_custom_call.1} parent=1 // pred_check
      _
    $region67: #{tpu_custom_call.1} parent=1 // pred_check_branch
      %108 = sbr.rel (0) target = $region69
    $region68: #{tpu_custom_call.1} parent=1 // pred_region
      %109 = dma.done [#allocation9], 4096
    $region69: #{tpu_custom_call.1} parent=1 // pred_fallthru
      _
    // Predicated region
    $region70: #{tpu_custom_call.1} parent=1 // pred_check
      _
    $region71: #{tpu_custom_call.1} parent=1 // pred_check_branch
      %111 = sbr.rel (0) target = $region73
    $region72: #{tpu_custom_call.1} parent=1 // pred_region
      %112 = dma.done [#allocation9], 4096
    $region73: #{tpu_custom_call.1} parent=1 // pred_fallthru
      _
    %v114 = vld [vmem:[#allocation2] sm:$0xff]
    %v115 = vld [vmem:[#allocation2 + $0x8] sm:$0xff]
    %v116 = vld [vmem:[#allocation2 + $0x10] sm:$0xff]
    %v117 = vld [vmem:[#allocation2 + $0x18] sm:$0xff]
    %v118 = vld [vmem:[%s5] sm:$0x1]
    %v119 = vld [vmem:[%s6] sm:$0x1]
    %120 = vadd.xlane.f32.xlu0 %v114
    %v121 = vpop.xlane.xlu0 %120
    %122 = vadd.xlane.f32.xlu0 %v115
    %v123 = vpop.xlane.xlu0 %122
    %124 = vadd.xlane.f32.xlu0 %v116
    %v125 = vpop.xlane.xlu0 %124
    %126 = vadd.xlane.f32.xlu0 %v117
    %v127 = vpop.xlane.xlu0 %126
    %v128 = vrcp.pop 128.0
    %v129 = vmul.f32 %v121, %v128
    %v130 = vmul.f32 %v123, %v128
    %v131 = vmul.f32 %v125, %v128
    %v132 = vmul.f32 %v127, %v128
    %v133 = vsub.f32 %v114, %v129
    %v134 = vsub.f32 %v115, %v130
    %v135 = vsub.f32 %v116, %v131
    %v136 = vsub.f32 %v117, %v132
    %v137 = vmul.f32 %v133, %v133
    %v138 = vmul.f32 %v134, %v134
    %v139 = vmul.f32 %v135, %v135
    %v140 = vmul.f32 %v136, %v136
    %141 = vadd.xlane.f32.xlu0 %v137
    %v142 = vpop.xlane.xlu0 %141
    %143 = vadd.xlane.f32.xlu0 %v138
    %v144 = vpop.xlane.xlu0 %143
    %145 = vadd.xlane.f32.xlu0 %v139
    %v146 = vpop.xlane.xlu0 %145
    %147 = vadd.xlane.f32.xlu0 %v140
    %v148 = vpop.xlane.xlu0 %147
    %v149 = vmul.f32 %v142, %v128
    %v150 = vmul.f32 %v144, %v128
    %v151 = vmul.f32 %v146, %v128
    %v152 = vmul.f32 %v148, %v128
    %v153 = vadd.f32 %v149, 1e-05
    %v154 = vadd.f32 %v150, 1e-05
    %v155 = vadd.f32 %v151, 1e-05
    %v156 = vadd.f32 %v152, 1e-05
    %v157 = vrsqrt.pop %v153
    %v158 = vrsqrt.pop %v154
    %v159 = vrsqrt.pop %v155
    %v160 = vrsqrt.pop %v156
    %v161 = vmul.f32 %v133, %v157
    %v162 = vmul.f32 %v134, %v158
    %v163 = vmul.f32 %v135, %v159
    %v164 = vmul.f32 %v136, %v160
    %v166 = vlaneseq
    %v167 = vshrl.u32 %v166, 7
    %v168 = vsub.s32 0, %v167
    %v169 = vrot.slane %v118, %v168
    %v171 = vmul.f32 %v161, %v169
    %v172 = vmul.f32 %v162, %v169
    %v173 = vmul.f32 %v163, %v169
    %v174 = vmul.f32 %v164, %v169
    %v176 = vlaneseq
    %v177 = vshrl.u32 %v176, 7
    %v178 = vsub.s32 0, %v177
    %v179 = vrot.slane %v119, %v178
    %v181 = vadd.f32 %v171, %v179
    %v182 = vadd.f32 %v172, %v179
    %v183 = vadd.f32 %v173, %v179
    %v184 = vadd.f32 %v174, %v179
    %v185 = vpack.c.bf16 %v182, %v181
    %v186 = vpack.c.bf16 %v184, %v183
    %v187 = vld [vmem:[#allocation5] sm:$0xff]
    %v188 = vld [vmem:[#allocation5 + $0x8] sm:$0xff]
    %v189 = vld [vmem:[#allocation5 + $0x10] sm:$0xff]
    %v190 = vld [vmem:[#allocation5 + $0x18] sm:$0xff]
    %v191 = vld [vmem:[#allocation5 + $0x20] sm:$0xff]
    %v192 = vld [vmem:[#allocation5 + $0x28] sm:$0xff]
    %v193 = vld [vmem:[#allocation5 + $0x30] sm:$0xff]
    %v194 = vld [vmem:[#allocation5 + $0x38] sm:$0xff]
    %v195 = vld [vmem:[#allocation5 + $0x40] sm:$0xff]
    %v196 = vld [vmem:[#allocation5 + $0x48] sm:$0xff]
    %v197 = vld [vmem:[#allocation5 + $0x50] sm:$0xff]
    %v198 = vld [vmem:[#allocation5 + $0x58] sm:$0xff]
    %v199 = vld [vmem:[#allocation5 + $0x60] sm:$0xff]
    %v200 = vld [vmem:[#allocation5 + $0x68] sm:$0xff]
    %v201 = vld [vmem:[#allocation5 + $0x70] sm:$0xff]
    %v202 = vld [vmem:[#allocation5 + $0x78] sm:$0xff]
    %v203 = vld [vmem:[%s2] sm:$0x3]
    %v205 = vlaneseq
    %v206 = vshrl.u32 %v205, 7
    %v207 = vsub.s32 0, %v206
    %v208 = vrot.slane %v203, %v207
    %v209 = vlaneseq
    %v210 = vshrl.u32 %v209, 7
    %v211 = vsub.s32 1, %v210
    %v212 = vrot.slane %v203, %v211
    %v231 = vunpack.c.l.b16 %v187
    %v232 = vunpack.c.h.b16 %v187
    %v233 = vunpack.c.l.b16 %v188
    %v234 = vunpack.c.h.b16 %v188
    %v235 = vunpack.c.l.b16 %v189
    %v236 = vunpack.c.h.b16 %v189
    %v237 = vunpack.c.l.b16 %v190
    %v238 = vunpack.c.h.b16 %v190
    %v239 = vunpack.c.l.b16 %v191
    %v240 = vunpack.c.h.b16 %v191
    %v241 = vunpack.c.l.b16 %v192
    %v242 = vunpack.c.h.b16 %v192
    %v243 = vunpack.c.l.b16 %v193
    %v244 = vunpack.c.h.b16 %v193
    %v245 = vunpack.c.l.b16 %v194
    %v246 = vunpack.c.h.b16 %v194
    %v247 = vunpack.c.l.b16 %v195
    %v248 = vunpack.c.h.b16 %v195
    %v249 = vunpack.c.l.b16 %v196
    %v250 = vunpack.c.h.b16 %v196
    %v251 = vunpack.c.l.b16 %v197
    %v252 = vunpack.c.h.b16 %v197
    %v253 = vunpack.c.l.b16 %v198
    %v254 = vunpack.c.h.b16 %v198
    %v255 = vunpack.c.l.b16 %v199
    %v256 = vunpack.c.h.b16 %v199
    %v257 = vunpack.c.l.b16 %v200
    %v258 = vunpack.c.h.b16 %v200
    %v259 = vunpack.c.l.b16 %v201
    %v260 = vunpack.c.h.b16 %v201
    %v261 = vunpack.c.l.b16 %v202
    %v262 = vunpack.c.h.b16 %v202
    %v263 = vpack.c.b16 %v233, %v231
    %v264 = vpack.c.b16 %v234, %v232
    %v265 = vpack.c.b16 %v237, %v235
    %v266 = vpack.c.b16 %v238, %v236
    %v267 = vpack.c.b16 %v241, %v239
    %v268 = vpack.c.b16 %v242, %v240
    %v269 = vpack.c.b16 %v245, %v243
    %v270 = vpack.c.b16 %v246, %v244
    %v271 = vpack.c.b16 %v249, %v247
    %v272 = vpack.c.b16 %v250, %v248
    %v273 = vpack.c.b16 %v253, %v251
    %v274 = vpack.c.b16 %v254, %v252
    %v275 = vpack.c.b16 %v257, %v255
    %v276 = vpack.c.b16 %v258, %v256
    %v277 = vpack.c.b16 %v261, %v259
    %v278 = vpack.c.b16 %v262, %v260
    %295 = vmatprep.subr.bf16.mxu0 %v264
    %296 = vmatpush1.bf16.msra.mxu0 %v263
    %297 = vmatprep.subr.bf16.mxu0 %v266
    %298 = vmatpush1.bf16.msra.mxu0 %v265
    %299 = vmatprep.subr.bf16.mxu0 %v268
    %300 = vmatpush1.bf16.msra.mxu0 %v267
    %301 = vmatprep.subr.bf16.mxu0 %v270
    %302 = vmatpush1.bf16.msra.mxu0 %v269
    %303 = vmatprep.subr.bf16.mxu0 %v272
    %304 = vmatpush1.bf16.msra.mxu0 %v271
    %305 = vmatprep.subr.bf16.mxu0 %v274
    %306 = vmatpush1.bf16.msra.mxu0 %v273
    %307 = vmatprep.subr.bf16.mxu0 %v276
    %308 = vmatpush1.bf16.msra.mxu0 %v275
    %309 = vmatprep.subr.bf16.mxu0 %v278
    %310 = vmatpush1.bf16.msra.mxu0 %v277
    %311 = vmatprep.subr.bf16.mxu0 0
    %312 = vmatpush1.bf16.msra.mxu0 0
    %313 = vmatprep.subr.bf16.mxu0 0
    %314 = vmatpush1.bf16.msra.mxu0 0
    %315 = vmatprep.subr.bf16.mxu0 0
    %316 = vmatpush1.bf16.msra.mxu0 0
    %317 = vmatprep.subr.bf16.mxu0 0
    %318 = vmatpush1.bf16.msra.mxu0 0
    %319 = vmatprep.subr.bf16.mxu0 0
    %320 = vmatpush1.bf16.msra.mxu0 0
    %321 = vmatprep.subr.bf16.mxu0 0
    %322 = vmatpush1.bf16.msra.mxu0 0
    %323 = vmatprep.subr.bf16.mxu0 0
    %324 = vmatpush1.bf16.msra.mxu0 0
    %325 = vmatprep.subr.bf16.mxu0 0
    %326 = vmatpush1.bf16.msra.mxu0 0
    %327 = vmatprep.mubr.bf16.mxu0 0
    %328 = vmatmul.mubr.bf16.gmra.mrb[0].mxu0 %v185
    %v329 = vpop.f32.mrb[0].mxu0
    %v330 = vadd.f32 %v208, %v329
    %v331 = vpop.f32.mrb[0].mxu0
    %v332 = vadd.f32 %v212, %v331
    %v333 = vpop.f32.mrb[0].mxu0
    %v334 = vadd.f32 %v208, %v333
    %v335 = vpop.f32.mrb[0].mxu0
    %v336 = vadd.f32 %v212, %v335
    %337 = vmatprep.mubr.bf16.mxu0 0
    %338 = vmatmul.mubr.bf16.gmra.mrb[0].mxu0 %v186
    %v339 = vpop.f32.mrb[0].mxu0
    %v340 = vadd.f32 %v208, %v339
    %v341 = vpop.f32.mrb[0].mxu0
    %v342 = vadd.f32 %v212, %v341
    %v343 = vpop.f32.mrb[0].mxu0
    %v344 = vadd.f32 %v208, %v343
    %v345 = vpop.f32.mrb[0].mxu0
    %v346 = vadd.f32 %v212, %v345
    %347 = vdwg.mxu0
    %v348 = vpack.c.bf16 %v334, %v330
    %v349 = vpack.c.bf16 %v336, %v332
    %v350 = vpack.c.bf16 %v344, %v340
    %v351 = vpack.c.bf16 %v346, %v342
    %353 = vrot.lane.b32.xlu0 %v348, 96
    %v354 = vpop.permute.xlu0 %353
    %355 = vrot.lane.b32.xlu0 %v348, 64
    %v356 = vpop.permute.xlu0 %355
    %357 = vrot.lane.b32.xlu0 %v348, 32
    %v358 = vpop.permute.xlu0 %357
    %360 = vrot.lane.b32.xlu0 %v350, 96
    %v361 = vpop.permute.xlu0 %360
    %362 = vrot.lane.b32.xlu0 %v350, 64
    %v363 = vpop.permute.xlu0 %362
    %364 = vrot.lane.b32.xlu0 %v350, 32
    %v365 = vpop.permute.xlu0 %364
    %367 = vrot.lane.b32.xlu0 %v349, 96
    %v368 = vpop.permute.xlu0 %367
    %370 = vrot.lane.b32.xlu0 %v349, 64
    %v371 = vpop.permute.xlu0 %370
    %373 = vrot.lane.b32.xlu0 %v349, 32
    %v374 = vpop.permute.xlu0 %373
    %377 = vrot.lane.b32.xlu0 %v351, 96
    %v378 = vpop.permute.xlu0 %377
    %380 = vrot.lane.b32.xlu0 %v351, 64
    %v381 = vpop.permute.xlu0 %380
    %383 = vrot.lane.b32.xlu0 %v351, 32
    %v384 = vpop.permute.xlu0 %383
    %vm386 = vcmask 261120
    %v388 = vsel %vm386, %v348, 0
    %390 = vmatprep.subr.bf16.mxu0 0
    %391 = vmatpush1.bf16.xpose.msra.mxu0 %v388
    %392 = vmatprep.subr.bf16.mxu0 0
    %393 = vmatpush1.bf16.xpose.msra.mxu0 0
    %394 = vmatprep.subr.bf16.mxu0 0
    %395 = vmatpush1.bf16.xpose.msra.mxu0 0
    %396 = vmatprep.subr.bf16.mxu0 0
    %397 = vmatpush1.bf16.xpose.msra.mxu0 0
    %398 = vmatprep.subr.bf16.mxu0 0
    %399 = vmatpush1.bf16.xpose.msra.mxu0 0
    %400 = vmatprep.subr.bf16.mxu0 0
    %401 = vmatpush1.bf16.xpose.msra.mxu0 0
    %402 = vmatprep.subr.bf16.mxu0 0
    %403 = vmatpush1.bf16.xpose.msra.mxu0 0
    %404 = vmatprep.subr.bf16.mxu0 0
    %405 = vmatpush1.bf16.xpose.msra.mxu0 0
    %406 = vmatprep.subr.bf16.mxu0 0
    %407 = vmatpush1.bf16.xpose.msra.mxu0 0
    %408 = vmatprep.subr.bf16.mxu0 0
    %409 = vmatpush1.bf16.xpose.msra.mxu0 0
    %410 = vmatprep.subr.bf16.mxu0 0
    %411 = vmatpush1.bf16.xpose.msra.mxu0 0
    %412 = vmatprep.subr.bf16.mxu0 0
    %413 = vmatpush1.bf16.xpose.msra.mxu0 0
    %414 = vmatprep.subr.bf16.mxu0 0
    %415 = vmatpush1.bf16.xpose.msra.mxu0 0
    %416 = vmatprep.subr.bf16.mxu0 0
    %417 = vmatpush1.bf16.xpose.msra.mxu0 0
    %418 = vmatprep.subr.bf16.mxu0 0
    %419 = vmatpush1.bf16.xpose.msra.mxu0 0
    %420 = vmatprep.subr.bf16.mxu0 0
    %421 = vmatpush1.bf16.xpose.msra.mxu0 0
    %422 = vmatprep.mubr.bf16.mxu0 0
    %423 = vmatmul.mubr.bf16.gmra.mrb[0].mxu0 %v388
    %v424 = vpop.f32.mrb[0].mxu0
    %v425 = vadd.f32 0.0, %v424
    %v426 = vpop.f32.mrb[0].mxu0
    %v427 = vpop.f32.mrb[0].mxu0
    %v428 = vadd.f32 0.0, %v427
    %v429 = vpop.f32.mrb[0].mxu0
    %430 = vdwg.mxu0
    %v432 = vsel %vm386, %v354, 0
    %434 = vmatprep.subr.bf16.mxu0 0
    %435 = vmatpush1.bf16.xpose.msra.mxu0 %v432
    %436 = vmatprep.subr.bf16.mxu0 0
    %437 = vmatpush1.bf16.xpose.msra.mxu0 0
    %438 = vmatprep.subr.bf16.mxu0 0
    %439 = vmatpush1.bf16.xpose.msra.mxu0 0
    %440 = vmatprep.subr.bf16.mxu0 0
    %441 = vmatpush1.bf16.xpose.msra.mxu0 0
    %442 = vmatprep.subr.bf16.mxu0 0
    %443 = vmatpush1.bf16.xpose.msra.mxu0 0
    %444 = vmatprep.subr.bf16.mxu0 0
    %445 = vmatpush1.bf16.xpose.msra.mxu0 0
    %446 = vmatprep.subr.bf16.mxu0 0
    %447 = vmatpush1.bf16.xpose.msra.mxu0 0
    %448 = vmatprep.subr.bf16.mxu0 0
    %449 = vmatpush1.bf16.xpose.msra.mxu0 0
    %450 = vmatprep.subr.bf16.mxu0 0
    %451 = vmatpush1.bf16.xpose.msra.mxu0 0
    %452 = vmatprep.subr.bf16.mxu0 0
    %453 = vmatpush1.bf16.xpose.msra.mxu0 0
    %454 = vmatprep.subr.bf16.mxu0 0
    %455 = vmatpush1.bf16.xpose.msra.mxu0 0
    %456 = vmatprep.subr.bf16.mxu0 0
    %457 = vmatpush1.bf16.xpose.msra.mxu0 0
    %458 = vmatprep.subr.bf16.mxu0 0
    %459 = vmatpush1.bf16.xpose.msra.mxu0 0
    %460 = vmatprep.subr.bf16.mxu0 0
    %461 = vmatpush1.bf16.xpose.msra.mxu0 0
    %462 = vmatprep.subr.bf16.mxu0 0
    %463 = vmatpush1.bf16.xpose.msra.mxu0 0
    %464 = vmatprep.subr.bf16.mxu0 0
    %465 = vmatpush1.bf16.xpose.msra.mxu0 0
    %466 = vmatprep.mubr.bf16.mxu0 0
    %467 = vmatmul.mubr.bf16.gmra.mrb[0].mxu0 %v432
    %v468 = vpop.f32.mrb[0].mxu0
    %v469 = vadd.f32 0.0, %v468
    %v470 = vpop.f32.mrb[0].mxu0
    %v471 = vpop.f32.mrb[0].mxu0
    %v472 = vadd.f32 0.0, %v471
    %v473 = vpop.f32.mrb[0].mxu0
    %474 = vdwg.mxu0
    %v476 = vsel %vm386, %v356, 0
    %478 = vmatprep.subr.bf16.mxu0 0
    %479 = vmatpush1.bf16.xpose.msra.mxu0 %v476
    %480 = vmatprep.subr.bf16.mxu0 0
    %481 = vmatpush1.bf16.xpose.msra.mxu0 0
    %482 = vmatprep.subr.bf16.mxu0 0
    %483 = vmatpush1.bf16.xpose.msra.mxu0 0
    %484 = vmatprep.subr.bf16.mxu0 0
    %485 = vmatpush1.bf16.xpose.msra.mxu0 0
    %486 = vmatprep.subr.bf16.mxu0 0
    %487 = vmatpush1.bf16.xpose.msra.mxu0 0
    %488 = vmatprep.subr.bf16.mxu0 0
    %489 = vmatpush1.bf16.xpose.msra.mxu0 0
    %490 = vmatprep.subr.bf16.mxu0 0
    %491 = vmatpush1.bf16.xpose.msra.mxu0 0
    %492 = vmatprep.subr.bf16.mxu0 0
    %493 = vmatpush1.bf16.xpose.msra.mxu0 0
    %494 = vmatprep.subr.bf16.mxu0 0
    %495 = vmatpush1.bf16.xpose.msra.mxu0 0
    %496 = vmatprep.subr.bf16.mxu0 0
    %497 = vmatpush1.bf16.xpose.msra.mxu0 0
    %498 = vmatprep.subr.bf16.mxu0 0
    %499 = vmatpush1.bf16.xpose.msra.mxu0 0
    %500 = vmatprep.subr.bf16.mxu0 0
    %501 = vmatpush1.bf16.xpose.msra.mxu0 0
    %502 = vmatprep.subr.bf16.mxu0 0
    %503 = vmatpush1.bf16.xpose.msra.mxu0 0
    %504 = vmatprep.subr.bf16.mxu0 0
    %505 = vmatpush1.bf16.xpose.msra.mxu0 0
    %506 = vmatprep.subr.bf16.mxu0 0
    %507 = vmatpush1.bf16.xpose.msra.mxu0 0
    %508 = vmatprep.subr.bf16.mxu0 0
    %509 = vmatpush1.bf16.xpose.msra.mxu0 0
    %510 = vmatprep.mubr.bf16.mxu0 0
    %511 = vmatmul.mubr.bf16.gmra.mrb[0].mxu0 %v476
    %v512 = vpop.f32.mrb[0].mxu0
    %v513 = vadd.f32 0.0, %v512
    %v514 = vpop.f32.mrb[0].mxu0
    %v515 = vpop.f32.mrb[0].mxu0
    %v516 = vadd.f32 0.0, %v515
    %v517 = vpop.f32.mrb[0].mxu0
    %518 = vdwg.mxu0
    %v520 = vsel %vm386, %v358, 0
    %522 = vmatprep.subr.bf16.mxu0 0
    %523 = vmatpush1.bf16.xpose.msra.mxu0 %v520
    %524 = vmatprep.subr.bf16.mxu0 0
    %525 = vmatpush1.bf16.xpose.msra.mxu0 0
    %526 = vmatprep.subr.bf16.mxu0 0
    %527 = vmatpush1.bf16.xpose.msra.mxu0 0
    %528 = vmatprep.subr.bf16.mxu0 0
    %529 = vmatpush1.bf16.xpose.msra.mxu0 0
    %530 = vmatprep.subr.bf16.mxu0 0
    %531 = vmatpush1.bf16.xpose.msra.mxu0 0
    %532 = vmatprep.subr.bf16.mxu0 0
    %533 = vmatpush1.bf16.xpose.msra.mxu0 0
    %534 = vmatprep.subr.bf16.mxu0 0
    %535 = vmatpush1.bf16.xpose.msra.mxu0 0
    %536 = vmatprep.subr.bf16.mxu0 0
    %537 = vmatpush1.bf16.xpose.msra.mxu0 0
    %538 = vmatprep.subr.bf16.mxu0 0
    %539 = vmatpush1.bf16.xpose.msra.mxu0 0
    %540 = vmatprep.subr.bf16.mxu0 0
    %541 = vmatpush1.bf16.xpose.msra.mxu0 0
    %542 = vmatprep.subr.bf16.mxu0 0
    %543 = vmatpush1.bf16.xpose.msra.mxu0 0
    %544 = vmatprep.subr.bf16.mxu0 0
    %545 = vmatpush1.bf16.xpose.msra.mxu0 0
    %546 = vmatprep.subr.bf16.mxu0 0
    %547 = vmatpush1.bf16.xpose.msra.mxu0 0
    %548 = vmatprep.subr.bf16.mxu0 0
    %549 = vmatpush1.bf16.xpose.msra.mxu0 0
    %550 = vmatprep.subr.bf16.mxu0 0
    %551 = vmatpush1.bf16.xpose.msra.mxu0 0
    %552 = vmatprep.subr.bf16.mxu0 0
    %553 = vmatpush1.bf16.xpose.msra.mxu0 0
    %554 = vmatprep.mubr.bf16.mxu0 0
    %555 = vmatmul.mubr.bf16.gmra.mrb[0].mxu0 %v520
    %v556 = vpop.f32.mrb[0].mxu0
    %v557 = vadd.f32 0.0, %v556
    %v558 = vpop.f32.mrb[0].mxu0
    %v559 = vpop.f32.mrb[0].mxu0
    %v560 = vadd.f32 0.0, %v559
    %v561 = vpop.f32.mrb[0].mxu0
    %562 = vdwg.mxu0
    %v564 = vsel %vm386, %v350, 0
    %566 = vmatprep.subr.bf16.mxu0 0
    %567 = vmatpush1.bf16.xpose.msra.mxu0 %v564
    %568 = vmatprep.subr.bf16.mxu0 0
    %569 = vmatpush1.bf16.xpose.msra.mxu0 0
    %570 = vmatprep.subr.bf16.mxu0 0
    %571 = vmatpush1.bf16.xpose.msra.mxu0 0
    %572 = vmatprep.subr.bf16.mxu0 0
    %573 = vmatpush1.bf16.xpose.msra.mxu0 0
    %574 = vmatprep.subr.bf16.mxu0 0
    %575 = vmatpush1.bf16.xpose.msra.mxu0 0
    %576 = vmatprep.subr.bf16.mxu0 0
    %577 = vmatpush1.bf16.xpose.msra.mxu0 0
    %578 = vmatprep.subr.bf16.mxu0 0
    %579 = vmatpush1.bf16.xpose.msra.mxu0 0
    %580 = vmatprep.subr.bf16.mxu0 0
    %581 = vmatpush1.bf16.xpose.msra.mxu0 0
    %582 = vmatprep.subr.bf16.mxu0 0
    %583 = vmatpush1.bf16.xpose.msra.mxu0 0
    %584 = vmatprep.subr.bf16.mxu0 0
    %585 = vmatpush1.bf16.xpose.msra.mxu0 0
    %586 = vmatprep.subr.bf16.mxu0 0
    %587 = vmatpush1.bf16.xpose.msra.mxu0 0
    %588 = vmatprep.subr.bf16.mxu0 0
    %589 = vmatpush1.bf16.xpose.msra.mxu0 0
    %590 = vmatprep.subr.bf16.mxu0 0
    %591 = vmatpush1.bf16.xpose.msra.mxu0 0
    %592 = vmatprep.subr.bf16.mxu0 0
    %593 = vmatpush1.bf16.xpose.msra.mxu0 0
    %594 = vmatprep.subr.bf16.mxu0 0
    %595 = vmatpush1.bf16.xpose.msra.mxu0 0
    %596 = vmatprep.subr.bf16.mxu0 0
    %597 = vmatpush1.bf16.xpose.msra.mxu0 0
    %598 = vmatprep.mubr.bf16.mxu0 0
    %599 = vmatmul.mubr.bf16.gmra.mrb[0].mxu0 %v564
    %v600 = vpop.f32.mrb[0].mxu0
    %v601 = vadd.f32 0.0, %v600
    %v602 = vpop.f32.mrb[0].mxu0
    %v603 = vpop.f32.mrb[0].mxu0
    %v604 = vadd.f32 0.0, %v603
    %v605 = vpop.f32.mrb[0].mxu0
    %606 = vdwg.mxu0
    %v608 = vsel %vm386, %v361, 0
    %610 = vmatprep.subr.bf16.mxu0 0
    %611 = vmatpush1.bf16.xpose.msra.mxu0 %v608
    %612 = vmatprep.subr.bf16.mxu0 0
    %613 = vmatpush1.bf16.xpose.msra.mxu0 0
    %614 = vmatprep.subr.bf16.mxu0 0
    %615 = vmatpush1.bf16.xpose.msra.mxu0 0
    %616 = vmatprep.subr.bf16.mxu0 0
    %617 = vmatpush1.bf16.xpose.msra.mxu0 0
    %618 = vmatprep.subr.bf16.mxu0 0
    %619 = vmatpush1.bf16.xpose.msra.mxu0 0
    %620 = vmatprep.subr.bf16.mxu0 0
    %621 = vmatpush1.bf16.xpose.msra.mxu0 0
    %622 = vmatprep.subr.bf16.mxu0 0
    %623 = vmatpush1.bf16.xpose.msra.mxu0 0
    %624 = vmatprep.subr.bf16.mxu0 0
    %625 = vmatpush1.bf16.xpose.msra.mxu0 0
    %626 = vmatprep.subr.bf16.mxu0 0
    %627 = vmatpush1.bf16.xpose.msra.mxu0 0
    %628 = vmatprep.subr.bf16.mxu0 0
    %629 = vmatpush1.bf16.xpose.msra.mxu0 0
    %630 = vmatprep.subr.bf16.mxu0 0
    %631 = vmatpush1.bf16.xpose.msra.mxu0 0
    %632 = vmatprep.subr.bf16.mxu0 0
    %633 = vmatpush1.bf16.xpose.msra.mxu0 0
    %634 = vmatprep.subr.bf16.mxu0 0
    %635 = vmatpush1.bf16.xpose.msra.mxu0 0
    %636 = vmatprep.subr.bf16.mxu0 0
    %637 = vmatpush1.bf16.xpose.msra.mxu0 0
    %638 = vmatprep.subr.bf16.mxu0 0
    %639 = vmatpush1.bf16.xpose.msra.mxu0 0
    %640 = vmatprep.subr.bf16.mxu0 0
    %641 = vmatpush1.bf16.xpose.msra.mxu0 0
    %642 = vmatprep.mubr.bf16.mxu0 0
    %643 = vmatmul.mubr.bf16.gmra.mrb[0].mxu0 %v608
    %v644 = vpop.f32.mrb[0].mxu0
    %v645 = vadd.f32 0.0, %v644
    %v646 = vpop.f32.mrb[0].mxu0
    %v647 = vpop.f32.mrb[0].mxu0
    %v648 = vadd.f32 0.0, %v647
    %v649 = vpop.f32.mrb[0].mxu0
    %650 = vdwg.mxu0
    %v652 = vsel %vm386, %v363, 0
    %654 = vmatprep.subr.bf16.mxu0 0
    %655 = vmatpush1.bf16.xpose.msra.mxu0 %v652
    %656 = vmatprep.subr.bf16.mxu0 0
    %657 = vmatpush1.bf16.xpose.msra.mxu0 0
    %658 = vmatprep.subr.bf16.mxu0 0
    %659 = vmatpush1.bf16.xpose.msra.mxu0 0
    %660 = vmatprep.subr.bf16.mxu0 0
    %661 = vmatpush1.bf16.xpose.msra.mxu0 0
    %662 = vmatprep.subr.bf16.mxu0 0
    %663 = vmatpush1.bf16.xpose.msra.mxu0 0
    %664 = vmatprep.subr.bf16.mxu0 0
    %665 = vmatpush1.bf16.xpose.msra.mxu0 0
    %666 = vmatprep.subr.bf16.mxu0 0
    %667 = vmatpush1.bf16.xpose.msra.mxu0 0
    %668 = vmatprep.subr.bf16.mxu0 0
    %669 = vmatpush1.bf16.xpose.msra.mxu0 0
    %670 = vmatprep.subr.bf16.mxu0 0
    %671 = vmatpush1.bf16.xpose.msra.mxu0 0
    %672 = vmatprep.subr.bf16.mxu0 0
    %673 = vmatpush1.bf16.xpose.msra.mxu0 0
    %674 = vmatprep.subr.bf16.mxu0 0
    %675 = vmatpush1.bf16.xpose.msra.mxu0 0
    %676 = vmatprep.subr.bf16.mxu0 0
    %677 = vmatpush1.bf16.xpose.msra.mxu0 0
    %678 = vmatprep.subr.bf16.mxu0 0
    %679 = vmatpush1.bf16.xpose.msra.mxu0 0
    %680 = vmatprep.subr.bf16.mxu0 0
    %681 = vmatpush1.bf16.xpose.msra.mxu0 0
    %682 = vmatprep.subr.bf16.mxu0 0
    %683 = vmatpush1.bf16.xpose.msra.mxu0 0
    %684 = vmatprep.subr.bf16.mxu0 0
    %685 = vmatpush1.bf16.xpose.msra.mxu0 0
    %686 = vmatprep.mubr.bf16.mxu0 0
    %687 = vmatmul.mubr.bf16.gmra.mrb[0].mxu0 %v652
    %v688 = vpop.f32.mrb[0].mxu0
    %v689 = vadd.f32 0.0, %v688
    %v690 = vpop.f32.mrb[0].mxu0
    %v691 = vpop.f32.mrb[0].mxu0
    %v692 = vadd.f32 0.0, %v691
    %v693 = vpop.f32.mrb[0].mxu0
    %694 = vdwg.mxu0
    %v696 = vsel %vm386, %v365, 0
    %698 = vmatprep.subr.bf16.mxu0 0
    %699 = vmatpush1.bf16.xpose.msra.mxu0 %v696
    %700 = vmatprep.subr.bf16.mxu0 0
    %701 = vmatpush1.bf16.xpose.msra.mxu0 0
    %702 = vmatprep.subr.bf16.mxu0 0
    %703 = vmatpush1.bf16.xpose.msra.mxu0 0
    %704 = vmatprep.subr.bf16.mxu0 0
    %705 = vmatpush1.bf16.xpose.msra.mxu0 0
    %706 = vmatprep.subr.bf16.mxu0 0
    %707 = vmatpush1.bf16.xpose.msra.mxu0 0
    %708 = vmatprep.subr.bf16.mxu0 0
    %709 = vmatpush1.bf16.xpose.msra.mxu0 0
    %710 = vmatprep.subr.bf16.mxu0 0
    %711 = vmatpush1.bf16.xpose.msra.mxu0 0
    %712 = vmatprep.subr.bf16.mxu0 0
    %713 = vmatpush1.bf16.xpose.msra.mxu0 0
    %714 = vmatprep.subr.bf16.mxu0 0
    %715 = vmatpush1.bf16.xpose.msra.mxu0 0
    %716 = vmatprep.subr.bf16.mxu0 0
    %717 = vmatpush1.bf16.xpose.msra.mxu0 0
    %718 = vmatprep.subr.bf16.mxu0 0
    %719 = vmatpush1.bf16.xpose.msra.mxu0 0
    %720 = vmatprep.subr.bf16.mxu0 0
    %721 = vmatpush1.bf16.xpose.msra.mxu0 0
    %722 = vmatprep.subr.bf16.mxu0 0
    %723 = vmatpush1.bf16.xpose.msra.mxu0 0
    %724 = vmatprep.subr.bf16.mxu0 0
    %725 = vmatpush1.bf16.xpose.msra.mxu0 0
    %726 = vmatprep.subr.bf16.mxu0 0
    %727 = vmatpush1.bf16.xpose.msra.mxu0 0
    %728 = vmatprep.subr.bf16.mxu0 0
    %729 = vmatpush1.bf16.xpose.msra.mxu0 0
    %730 = vmatprep.mubr.bf16.mxu0 0
    %731 = vmatmul.mubr.bf16.gmra.mrb[0].mxu0 %v696
    %v732 = vpop.f32.mrb[0].mxu0
    %v733 = vadd.f32 0.0, %v732
    %v734 = vpop.f32.mrb[0].mxu0
    %v735 = vpop.f32.mrb[0].mxu0
    %v736 = vadd.f32 0.0, %v735
    %v737 = vpop.f32.mrb[0].mxu0
    %738 = vdwg.mxu0
    %vm739 = vcmask 130048
    %v740 = vsel %vm739, %v425, -inf
    %741 = vmax.xlane.f32.xlu0 %v740
    %v742 = vpop.xlane.xlu0 %741
    %v743 = vsel %vm739, %v428, -inf
    %744 = vmax.xlane.f32.xlu0 %v743
    %v745 = vpop.xlane.xlu0 %744
    %v746 = vsel %vm739, %v469, -inf
    %747 = vmax.xlane.f32.xlu0 %v746
    %v748 = vpop.xlane.xlu0 %747
    %v749 = vsel %vm739, %v472, -inf
    %750 = vmax.xlane.f32.xlu0 %v749
    %v751 = vpop.xlane.xlu0 %750
    %v752 = vsel %vm739, %v513, -inf
    %753 = vmax.xlane.f32.xlu0 %v752
    %v754 = vpop.xlane.xlu0 %753
    %v755 = vsel %vm739, %v516, -inf
    %756 = vmax.xlane.f32.xlu0 %v755
    %v757 = vpop.xlane.xlu0 %756
    %v758 = vsel %vm739, %v557, -inf
    %759 = vmax.xlane.f32.xlu0 %v758
    %v760 = vpop.xlane.xlu0 %759
    %v761 = vsel %vm739, %v560, -inf
    %762 = vmax.xlane.f32.xlu0 %v761
    %v763 = vpop.xlane.xlu0 %762
    %v764 = vsel %vm739, %v601, -inf
    %765 = vmax.xlane.f32.xlu0 %v764
    %v766 = vpop.xlane.xlu0 %765
    %v767 = vsel %vm739, %v604, -inf
    %768 = vmax.xlane.f32.xlu0 %v767
    %v769 = vpop.xlane.xlu0 %768
    %v770 = vsel %vm739, %v645, -inf
    %771 = vmax.xlane.f32.xlu0 %v770
    %v772 = vpop.xlane.xlu0 %771
    %v773 = vsel %vm739, %v648, -inf
    %774 = vmax.xlane.f32.xlu0 %v773
    %v775 = vpop.xlane.xlu0 %774
    %v776 = vsel %vm739, %v689, -inf
    %777 = vmax.xlane.f32.xlu0 %v776
    %v778 = vpop.xlane.xlu0 %777
    %v779 = vsel %vm739, %v692, -inf
    %780 = vmax.xlane.f32.xlu0 %v779
    %v781 = vpop.xlane.xlu0 %780
    %v782 = vsel %vm739, %v733, -inf
    %783 = vmax.xlane.f32.xlu0 %v782
    %v784 = vpop.xlane.xlu0 %783
    %v785 = vsel %vm739, %v736, -inf
    %786 = vmax.xlane.f32.xlu0 %v785
    %v787 = vpop.xlane.xlu0 %786
    %v788 = vsub.f32 %v425, %v742
    %v789 = vsub.f32 %v428, %v745
    %v790 = vsub.f32 %v469, %v748
    %v791 = vsub.f32 %v472, %v751
    %v792 = vsub.f32 %v513, %v754
    %v793 = vsub.f32 %v516, %v757
    %v794 = vsub.f32 %v557, %v760
    %v795 = vsub.f32 %v560, %v763
    %v796 = vsub.f32 %v601, %v766
    %v797 = vsub.f32 %v604, %v769
    %v798 = vsub.f32 %v645, %v772
    %v799 = vsub.f32 %v648, %v775
    %v800 = vsub.f32 %v689, %v778
    %v801 = vsub.f32 %v692, %v781
    %v802 = vsub.f32 %v733, %v784
    %v803 = vsub.f32 %v736, %v787
    %v804 = vmul.f32 %v788, 1.442695
    %v805 = vpow.pop %v804
    %v806 = vmul.f32 %v789, 1.442695
    %v807 = vpow.pop %v806
    %v808 = vmul.f32 %v790, 1.442695
    %v809 = vpow.pop %v808
    %v810 = vmul.f32 %v791, 1.442695
    %v811 = vpow.pop %v810
    %v812 = vmul.f32 %v792, 1.442695
    %v813 = vpow.pop %v812
    %v814 = vmul.f32 %v793, 1.442695
    %v815 = vpow.pop %v814
    %v816 = vmul.f32 %v794, 1.442695
    %v817 = vpow.pop %v816
    %v818 = vmul.f32 %v795, 1.442695
    %v819 = vpow.pop %v818
    %v820 = vmul.f32 %v796, 1.442695
    %v821 = vpow.pop %v820
    %v822 = vmul.f32 %v797, 1.442695
    %v823 = vpow.pop %v822
    %v824 = vmul.f32 %v798, 1.442695
    %v825 = vpow.pop %v824
    %v826 = vmul.f32 %v799, 1.442695
    %v827 = vpow.pop %v826
    %v828 = vmul.f32 %v800, 1.442695
    %v829 = vpow.pop %v828
    %v830 = vmul.f32 %v801, 1.442695
    %v831 = vpow.pop %v830
    %v832 = vmul.f32 %v802, 1.442695
    %v833 = vpow.pop %v832
    %v834 = vmul.f32 %v803, 1.442695
    %v835 = vpow.pop %v834
    %v836 = vsel %vm739, %v805, 0.0
    %837 = vadd.xlane.f32.xlu0 %v836
    %v838 = vpop.xlane.xlu0 %837
    %v839 = vsel %vm739, %v807, 0.0
    %840 = vadd.xlane.f32.xlu0 %v839
    %v841 = vpop.xlane.xlu0 %840
    %v842 = vsel %vm739, %v809, 0.0
    %843 = vadd.xlane.f32.xlu0 %v842
    %v844 = vpop.xlane.xlu0 %843
    %v845 = vsel %vm739, %v811, 0.0
    %846 = vadd.xlane.f32.xlu0 %v845
    %v847 = vpop.xlane.xlu0 %846
    %v848 = vsel %vm739, %v813, 0.0
    %849 = vadd.xlane.f32.xlu0 %v848
    %v850 = vpop.xlane.xlu0 %849
    %v851 = vsel %vm739, %v815, 0.0
    %852 = vadd.xlane.f32.xlu0 %v851
    %v853 = vpop.xlane.xlu0 %852
    %v854 = vsel %vm739, %v817, 0.0
    %855 = vadd.xlane.f32.xlu0 %v854
    %v856 = vpop.xlane.xlu0 %855
    %v857 = vsel %vm739, %v819, 0.0
    %858 = vadd.xlane.f32.xlu0 %v857
    %v859 = vpop.xlane.xlu0 %858
    %v860 = vsel %vm739, %v821, 0.0
    %861 = vadd.xlane.f32.xlu0 %v860
    %v862 = vpop.xlane.xlu0 %861
    %v863 = vsel %vm739, %v823, 0.0
    %864 = vadd.xlane.f32.xlu0 %v863
    %v865 = vpop.xlane.xlu0 %864
    %v866 = vsel %vm739, %v825, 0.0
    %867 = vadd.xlane.f32.xlu0 %v866
    %v868 = vpop.xlane.xlu0 %867
    %v869 = vsel %vm739, %v827, 0.0
    %870 = vadd.xlane.f32.xlu0 %v869
    %v871 = vpop.xlane.xlu0 %870
    %v872 = vsel %vm739, %v829, 0.0
    %873 = vadd.xlane.f32.xlu0 %v872
    %v874 = vpop.xlane.xlu0 %873
    %v875 = vsel %vm739, %v831, 0.0
    %876 = vadd.xlane.f32.xlu0 %v875
    %v877 = vpop.xlane.xlu0 %876
    %v878 = vsel %vm739, %v833, 0.0
    %879 = vadd.xlane.f32.xlu0 %v878
    %v880 = vpop.xlane.xlu0 %879
    %v881 = vsel %vm739, %v835, 0.0
    %882 = vadd.xlane.f32.xlu0 %v881
    %v883 = vpop.xlane.xlu0 %882
    %v884 = vrcp.pop %v838
    %v885 = vrcp.pop %v841
    %v886 = vrcp.pop %v844
    %v887 = vrcp.pop %v847
    %v888 = vrcp.pop %v850
    %v889 = vrcp.pop %v853
    %v890 = vrcp.pop %v856
    %v891 = vrcp.pop %v859
    %v892 = vrcp.pop %v862
    %v893 = vrcp.pop %v865
    %v894 = vrcp.pop %v868
    %v895 = vrcp.pop %v871
    %v896 = vrcp.pop %v874
    %v897 = vrcp.pop %v877
    %v898 = vrcp.pop %v880
    %v899 = vrcp.pop %v883
    %v900 = vmul.f32 %v805, %v884
    %v901 = vmul.f32 %v807, %v885
    %v902 = vmul.f32 %v809, %v886
    %v903 = vmul.f32 %v811, %v887
    %v904 = vmul.f32 %v813, %v888
    %v905 = vmul.f32 %v815, %v889
    %v906 = vmul.f32 %v817, %v890
    %v907 = vmul.f32 %v819, %v891
    %v908 = vmul.f32 %v821, %v892
    %v909 = vmul.f32 %v823, %v893
    %v910 = vmul.f32 %v825, %v894
    %v911 = vmul.f32 %v827, %v895
    %v912 = vmul.f32 %v829, %v896
    %v913 = vmul.f32 %v831, %v897
    %v914 = vmul.f32 %v833, %v898
    %v915 = vmul.f32 %v835, %v899
    %v916 = vpack.c.bf16 %v901, %v900
    %v917 = vpack.c.bf16 %v903, %v902
    %v918 = vpack.c.bf16 %v905, %v904
    %v919 = vpack.c.bf16 %v907, %v906
    %v920 = vpack.c.bf16 %v909, %v908
    %v921 = vpack.c.bf16 %v911, %v910
    %v922 = vpack.c.bf16 %v913, %v912
    %v923 = vpack.c.bf16 %v915, %v914
    %v925 = vsel %vm739, %v916, 0
    %927 = vmatprep.subr.bf16.mxu0 0
    %928 = vmatpush1.bf16.msra.mxu0 %v349
    %929 = vmatprep.subr.bf16.mxu0 0
    %930 = vmatpush1.bf16.msra.mxu0 0
    %931 = vmatprep.subr.bf16.mxu0 0
    %932 = vmatpush1.bf16.msra.mxu0 0
    %933 = vmatprep.subr.bf16.mxu0 0
    %934 = vmatpush1.bf16.msra.mxu0 0
    %935 = vmatprep.subr.bf16.mxu0 0
    %936 = vmatpush1.bf16.msra.mxu0 0
    %937 = vmatprep.subr.bf16.mxu0 0
    %938 = vmatpush1.bf16.msra.mxu0 0
    %939 = vmatprep.subr.bf16.mxu0 0
    %940 = vmatpush1.bf16.msra.mxu0 0
    %941 = vmatprep.subr.bf16.mxu0 0
    %942 = vmatpush1.bf16.msra.mxu0 0
    %943 = vmatprep.subr.bf16.mxu0 0
    %944 = vmatpush1.bf16.msra.mxu0 0
    %945 = vmatprep.subr.bf16.mxu0 0
    %946 = vmatpush1.bf16.msra.mxu0 0
    %947 = vmatprep.subr.bf16.mxu0 0
    %948 = vmatpush1.bf16.msra.mxu0 0
    %949 = vmatprep.subr.bf16.mxu0 0
    %950 = vmatpush1.bf16.msra.mxu0 0
    %951 = vmatprep.subr.bf16.mxu0 0
    %952 = vmatpush1.bf16.msra.mxu0 0
    %953 = vmatprep.subr.bf16.mxu0 0
    %954 = vmatpush1.bf16.msra.mxu0 0
    %955 = vmatprep.subr.bf16.mxu0 0
    %956 = vmatpush1.bf16.msra.mxu0 0
    %957 = vmatprep.subr.bf16.mxu0 0
    %958 = vmatpush1.bf16.msra.mxu0 0
    %959 = vmatprep.mubr.bf16.mxu0 0
    %960 = vmatmul.mubr.bf16.gmra.mrb[0].mxu0 %v925
    %v961 = vpop.f32.mrb[0].mxu0
    %v962 = vadd.f32 0.0, %v961
    %v963 = vpop.f32.mrb[0].mxu0
    %v964 = vpop.f32.mrb[0].mxu0
    %v965 = vadd.f32 0.0, %v964
    %v966 = vpop.f32.mrb[0].mxu0
    %967 = vdwg.mxu0
    %v969 = vsel %vm739, %v917, 0
    %971 = vmatprep.subr.bf16.mxu0 0
    %972 = vmatpush1.bf16.msra.mxu0 %v368
    %973 = vmatprep.subr.bf16.mxu0 0
    %974 = vmatpush1.bf16.msra.mxu0 0
    %975 = vmatprep.subr.bf16.mxu0 0
    %976 = vmatpush1.bf16.msra.mxu0 0
    %977 = vmatprep.subr.bf16.mxu0 0
    %978 = vmatpush1.bf16.msra.mxu0 0
    %979 = vmatprep.subr.bf16.mxu0 0
    %980 = vmatpush1.bf16.msra.mxu0 0
    %981 = vmatprep.subr.bf16.mxu0 0
    %982 = vmatpush1.bf16.msra.mxu0 0
    %983 = vmatprep.subr.bf16.mxu0 0
    %984 = vmatpush1.bf16.msra.mxu0 0
    %985 = vmatprep.subr.bf16.mxu0 0
    %986 = vmatpush1.bf16.msra.mxu0 0
    %987 = vmatprep.subr.bf16.mxu0 0
    %988 = vmatpush1.bf16.msra.mxu0 0
    %989 = vmatprep.subr.bf16.mxu0 0
    %990 = vmatpush1.bf16.msra.mxu0 0
    %991 = vmatprep.subr.bf16.mxu0 0
    %992 = vmatpush1.bf16.msra.mxu0 0
    %993 = vmatprep.subr.bf16.mxu0 0
    %994 = vmatpush1.bf16.msra.mxu0 0
    %995 = vmatprep.subr.bf16.mxu0 0
    %996 = vmatpush1.bf16.msra.mxu0 0
    %997 = vmatprep.subr.bf16.mxu0 0
    %998 = vmatpush1.bf16.msra.mxu0 0
    %999 = vmatprep.subr.bf16.mxu0 0
    %1000 = vmatpush1.bf16.msra.mxu0 0
    %1001 = vmatprep.subr.bf16.mxu0 0
    %1002 = vmatpush1.bf16.msra.mxu0 0
    %1003 = vmatprep.mubr.bf16.mxu0 0
    %1004 = vmatmul.mubr.bf16.gmra.mrb[0].mxu0 %v969
    %v1005 = vpop.f32.mrb[0].mxu0
    %v1006 = vadd.f32 0.0, %v1005
    %v1007 = vpop.f32.mrb[0].mxu0
    %v1008 = vpop.f32.mrb[0].mxu0
    %v1009 = vadd.f32 0.0, %v1008
    %v1010 = vpop.f32.mrb[0].mxu0
    %1011 = vdwg.mxu0
    %v1013 = vsel %vm739, %v918, 0
    %1015 = vmatprep.subr.bf16.mxu0 0
    %1016 = vmatpush1.bf16.msra.mxu0 %v371
    %1017 = vmatprep.subr.bf16.mxu0 0
    %1018 = vmatpush1.bf16.msra.mxu0 0
    %1019 = vmatprep.subr.bf16.mxu0 0
    %1020 = vmatpush1.bf16.msra.mxu0 0
    %1021 = vmatprep.subr.bf16.mxu0 0
    %1022 = vmatpush1.bf16.msra.mxu0 0
    %1023 = vmatprep.subr.bf16.mxu0 0
    %1024 = vmatpush1.bf16.msra.mxu0 0
    %1025 = vmatprep.subr.bf16.mxu0 0
    %1026 = vmatpush1.bf16.msra.mxu0 0
    %1027 = vmatprep.subr.bf16.mxu0 0
    %1028 = vmatpush1.bf16.msra.mxu0 0
    %1029 = vmatprep.subr.bf16.mxu0 0
    %1030 = vmatpush1.bf16.msra.mxu0 0
    %1031 = vmatprep.subr.bf16.mxu0 0
    %1032 = vmatpush1.bf16.msra.mxu0 0
    %1033 = vmatprep.subr.bf16.mxu0 0
    %1034 = vmatpush1.bf16.msra.mxu0 0
    %1035 = vmatprep.subr.bf16.mxu0 0
    %1036 = vmatpush1.bf16.msra.mxu0 0
    %1037 = vmatprep.subr.bf16.mxu0 0
    %1038 = vmatpush1.bf16.msra.mxu0 0
    %1039 = vmatprep.subr.bf16.mxu0 0
    %1040 = vmatpush1.bf16.msra.mxu0 0
    %1041 = vmatprep.subr.bf16.mxu0 0
    %1042 = vmatpush1.bf16.msra.mxu0 0
    %1043 = vmatprep.subr.bf16.mxu0 0
    %1044 = vmatpush1.bf16.msra.mxu0 0
    %1045 = vmatprep.subr.bf16.mxu0 0
    %1046 = vmatpush1.bf16.msra.mxu0 0
    %1047 = vmatprep.mubr.bf16.mxu0 0
    %1048 = vmatmul.mubr.bf16.gmra.mrb[0].mxu0 %v1013
    %v1049 = vpop.f32.mrb[0].mxu0
    %v1050 = vadd.f32 0.0, %v1049
    %v1051 = vpop.f32.mrb[0].mxu0
    %v1052 = vpop.f32.mrb[0].mxu0
    %v1053 = vadd.f32 0.0, %v1052
    %v1054 = vpop.f32.mrb[0].mxu0
    %1055 = vdwg.mxu0
    %v1057 = vsel %vm739, %v919, 0
    %1059 = vmatprep.subr.bf16.mxu0 0
    %1060 = vmatpush1.bf16.msra.mxu0 %v374
    %1061 = vmatprep.subr.bf16.mxu0 0
    %1062 = vmatpush1.bf16.msra.mxu0 0
    %1063 = vmatprep.subr.bf16.mxu0 0
    %1064 = vmatpush1.bf16.msra.mxu0 0
    %1065 = vmatprep.subr.bf16.mxu0 0
    %1066 = vmatpush1.bf16.msra.mxu0 0
    %1067 = vmatprep.subr.bf16.mxu0 0
    %1068 = vmatpush1.bf16.msra.mxu0 0
    %1069 = vmatprep.subr.bf16.mxu0 0
    %1070 = vmatpush1.bf16.msra.mxu0 0
    %1071 = vmatprep.subr.bf16.mxu0 0
    %1072 = vmatpush1.bf16.msra.mxu0 0
    %1073 = vmatprep.subr.bf16.mxu0 0
    %1074 = vmatpush1.bf16.msra.mxu0 0
    %1075 = vmatprep.subr.bf16.mxu0 0
    %1076 = vmatpush1.bf16.msra.mxu0 0
    %1077 = vmatprep.subr.bf16.mxu0 0
    %1078 = vmatpush1.bf16.msra.mxu0 0
    %1079 = vmatprep.subr.bf16.mxu0 0
    %1080 = vmatpush1.bf16.msra.mxu0 0
    %1081 = vmatprep.subr.bf16.mxu0 0
    %1082 = vmatpush1.bf16.msra.mxu0 0
    %1083 = vmatprep.subr.bf16.mxu0 0
    %1084 = vmatpush1.bf16.msra.mxu0 0
    %1085 = vmatprep.subr.bf16.mxu0 0
    %1086 = vmatpush1.bf16.msra.mxu0 0
    %1087 = vmatprep.subr.bf16.mxu0 0
    %1088 = vmatpush1.bf16.msra.mxu0 0
    %1089 = vmatprep.subr.bf16.mxu0 0
    %1090 = vmatpush1.bf16.msra.mxu0 0
    %1091 = vmatprep.mubr.bf16.mxu0 0
    %1092 = vmatmul.mubr.bf16.gmra.mrb[0].mxu0 %v1057
    %v1093 = vpop.f32.mrb[0].mxu0
    %v1094 = vadd.f32 0.0, %v1093
    %v1095 = vpop.f32.mrb[0].mxu0
    %v1096 = vpop.f32.mrb[0].mxu0
    %v1097 = vadd.f32 0.0, %v1096
    %v1098 = vpop.f32.mrb[0].mxu0
    %1099 = vdwg.mxu0
    %v1101 = vsel %vm739, %v920, 0
    %1103 = vmatprep.subr.bf16.mxu0 0
    %1104 = vmatpush1.bf16.msra.mxu0 %v351
    %1105 = vmatprep.subr.bf16.mxu0 0
    %1106 = vmatpush1.bf16.msra.mxu0 0
    %1107 = vmatprep.subr.bf16.mxu0 0
    %1108 = vmatpush1.bf16.msra.mxu0 0
    %1109 = vmatprep.subr.bf16.mxu0 0
    %1110 = vmatpush1.bf16.msra.mxu0 0
    %1111 = vmatprep.subr.bf16.mxu0 0
    %1112 = vmatpush1.bf16.msra.mxu0 0
    %1113 = vmatprep.subr.bf16.mxu0 0
    %1114 = vmatpush1.bf16.msra.mxu0 0
    %1115 = vmatprep.subr.bf16.mxu0 0
    %1116 = vmatpush1.bf16.msra.mxu0 0
    %1117 = vmatprep.subr.bf16.mxu0 0
    %1118 = vmatpush1.bf16.msra.mxu0 0
    %1119 = vmatprep.subr.bf16.mxu0 0
    %1120 = vmatpush1.bf16.msra.mxu0 0
    %1121 = vmatprep.subr.bf16.mxu0 0
    %1122 = vmatpush1.bf16.msra.mxu0 0
    %1123 = vmatprep.subr.bf16.mxu0 0
    %1124 = vmatpush1.bf16.msra.mxu0 0
    %1125 = vmatprep.subr.bf16.mxu0 0
    %1126 = vmatpush1.bf16.msra.mxu0 0
    %1127 = vmatprep.subr.bf16.mxu0 0
    %1128 = vmatpush1.bf16.msra.mxu0 0
    %1129 = vmatprep.subr.bf16.mxu0 0
    %1130 = vmatpush1.bf16.msra.mxu0 0
    %1131 = vmatprep.subr.bf16.mxu0 0
    %1132 = vmatpush1.bf16.msra.mxu0 0
    %1133 = vmatprep.subr.bf16.mxu0 0
    %1134 = vmatpush1.bf16.msra.mxu0 0
    %1135 = vmatprep.mubr.bf16.mxu0 0
    %1136 = vmatmul.mubr.bf16.gmra.mrb[0].mxu0 %v1101
    %v1137 = vpop.f32.mrb[0].mxu0
    %v1138 = vadd.f32 0.0, %v1137
    %v1139 = vpop.f32.mrb[0].mxu0
    %v1140 = vpop.f32.mrb[0].mxu0
    %v1141 = vadd.f32 0.0, %v1140
    %v1142 = vpop.f32.mrb[0].mxu0
    %1143 = vdwg.mxu0
    %v1145 = vsel %vm739, %v921, 0
    %1147 = vmatprep.subr.bf16.mxu0 0
    %1148 = vmatpush1.bf16.msra.mxu0 %v378
    %1149 = vmatprep.subr.bf16.mxu0 0
    %1150 = vmatpush1.bf16.msra.mxu0 0
    %1151 = vmatprep.subr.bf16.mxu0 0
    %1152 = vmatpush1.bf16.msra.mxu0 0
    %1153 = vmatprep.subr.bf16.mxu0 0
    %1154 = vmatpush1.bf16.msra.mxu0 0
    %1155 = vmatprep.subr.bf16.mxu0 0
    %1156 = vmatpush1.bf16.msra.mxu0 0
    %1157 = vmatprep.subr.bf16.mxu0 0
    %1158 = vmatpush1.bf16.msra.mxu0 0
    %1159 = vmatprep.subr.bf16.mxu0 0
    %1160 = vmatpush1.bf16.msra.mxu0 0
    %1161 = vmatprep.subr.bf16.mxu0 0
    %1162 = vmatpush1.bf16.msra.mxu0 0
    %1163 = vmatprep.subr.bf16.mxu0 0
    %1164 = vmatpush1.bf16.msra.mxu0 0
    %1165 = vmatprep.subr.bf16.mxu0 0
    %1166 = vmatpush1.bf16.msra.mxu0 0
    %1167 = vmatprep.subr.bf16.mxu0 0
    %1168 = vmatpush1.bf16.msra.mxu0 0
    %1169 = vmatprep.subr.bf16.mxu0 0
    %1170 = vmatpush1.bf16.msra.mxu0 0
    %1171 = vmatprep.subr.bf16.mxu0 0
    %1172 = vmatpush1.bf16.msra.mxu0 0
    %1173 = vmatprep.subr.bf16.mxu0 0
    %1174 = vmatpush1.bf16.msra.mxu0 0
    %1175 = vmatprep.subr.bf16.mxu0 0
    %1176 = vmatpush1.bf16.msra.mxu0 0
    %1177 = vmatprep.subr.bf16.mxu0 0
    %1178 = vmatpush1.bf16.msra.mxu0 0
    %1179 = vmatprep.mubr.bf16.mxu0 0
    %1180 = vmatmul.mubr.bf16.gmra.mrb[0].mxu0 %v1145
    %v1181 = vpop.f32.mrb[0].mxu0
    %v1182 = vadd.f32 0.0, %v1181
    %v1183 = vpop.f32.mrb[0].mxu0
    %v1184 = vpop.f32.mrb[0].mxu0
    %v1185 = vadd.f32 0.0, %v1184
    %v1186 = vpop.f32.mrb[0].mxu0
    %1187 = vdwg.mxu0
    %v1189 = vsel %vm739, %v922, 0
    %1191 = vmatprep.subr.bf16.mxu0 0
    %1192 = vmatpush1.bf16.msra.mxu0 %v381
    %1193 = vmatprep.subr.bf16.mxu0 0
    %1194 = vmatpush1.bf16.msra.mxu0 0
    %1195 = vmatprep.subr.bf16.mxu0 0
    %1196 = vmatpush1.bf16.msra.mxu0 0
    %1197 = vmatprep.subr.bf16.mxu0 0
    %1198 = vmatpush1.bf16.msra.mxu0 0
    %1199 = vmatprep.subr.bf16.mxu0 0
    %1200 = vmatpush1.bf16.msra.mxu0 0
    %1201 = vmatprep.subr.bf16.mxu0 0
    %1202 = vmatpush1.bf16.msra.mxu0 0
    %1203 = vmatprep.subr.bf16.mxu0 0
    %1204 = vmatpush1.bf16.msra.mxu0 0
    %1205 = vmatprep.subr.bf16.mxu0 0
    %1206 = vmatpush1.bf16.msra.mxu0 0
    %1207 = vmatprep.subr.bf16.mxu0 0
    %1208 = vmatpush1.bf16.msra.mxu0 0
    %1209 = vmatprep.subr.bf16.mxu0 0
    %1210 = vmatpush1.bf16.msra.mxu0 0
    %1211 = vmatprep.subr.bf16.mxu0 0
    %1212 = vmatpush1.bf16.msra.mxu0 0
    %1213 = vmatprep.subr.bf16.mxu0 0
    %1214 = vmatpush1.bf16.msra.mxu0 0
    %1215 = vmatprep.subr.bf16.mxu0 0
    %1216 = vmatpush1.bf16.msra.mxu0 0
    %1217 = vmatprep.subr.bf16.mxu0 0
    %1218 = vmatpush1.bf16.msra.mxu0 0
    %1219 = vmatprep.subr.bf16.mxu0 0
    %1220 = vmatpush1.bf16.msra.mxu0 0
    %1221 = vmatprep.subr.bf16.mxu0 0
    %1222 = vmatpush1.bf16.msra.mxu0 0
    %1223 = vmatprep.mubr.bf16.mxu0 0
    %1224 = vmatmul.mubr.bf16.gmra.mrb[0].mxu0 %v1189
    %v1225 = vpop.f32.mrb[0].mxu0
    %v1226 = vadd.f32 0.0, %v1225
    %v1227 = vpop.f32.mrb[0].mxu0
    %v1228 = vpop.f32.mrb[0].mxu0
    %v1229 = vadd.f32 0.0, %v1228
    %v1230 = vpop.f32.mrb[0].mxu0
    %1231 = vdwg.mxu0
    %v1233 = vsel %vm739, %v923, 0
    %1235 = vmatprep.subr.bf16.mxu0 0
    %1236 = vmatpush1.bf16.msra.mxu0 %v384
    %1237 = vmatprep.subr.bf16.mxu0 0
    %1238 = vmatpush1.bf16.msra.mxu0 0
    %1239 = vmatprep.subr.bf16.mxu0 0
    %1240 = vmatpush1.bf16.msra.mxu0 0
    %1241 = vmatprep.subr.bf16.mxu0 0
    %1242 = vmatpush1.bf16.msra.mxu0 0
    %1243 = vmatprep.subr.bf16.mxu0 0
    %1244 = vmatpush1.bf16.msra.mxu0 0
    %1245 = vmatprep.subr.bf16.mxu0 0
    %1246 = vmatpush1.bf16.msra.mxu0 0
    %1247 = vmatprep.subr.bf16.mxu0 0
    %1248 = vmatpush1.bf16.msra.mxu0 0
    %1249 = vmatprep.subr.bf16.mxu0 0
    %1250 = vmatpush1.bf16.msra.mxu0 0
    %1251 = vmatprep.subr.bf16.mxu0 0
    %1252 = vmatpush1.bf16.msra.mxu0 0
    %1253 = vmatprep.subr.bf16.mxu0 0
    %1254 = vmatpush1.bf16.msra.mxu0 0
    %1255 = vmatprep.subr.bf16.mxu0 0
    %1256 = vmatpush1.bf16.msra.mxu0 0
    %1257 = vmatprep.subr.bf16.mxu0 0
    %1258 = vmatpush1.bf16.msra.mxu0 0
    %1259 = vmatprep.subr.bf16.mxu0 0
    %1260 = vmatpush1.bf16.msra.mxu0 0
    %1261 = vmatprep.subr.bf16.mxu0 0
    %1262 = vmatpush1.bf16.msra.mxu0 0
    %1263 = vmatprep.subr.bf16.mxu0 0
    %1264 = vmatpush1.bf16.msra.mxu0 0
    %1265 = vmatprep.subr.bf16.mxu0 0
    %1266 = vmatpush1.bf16.msra.mxu0 0
    %1267 = vmatprep.mubr.bf16.mxu0 0
    %1268 = vmatmul.mubr.bf16.gmra.mrb[0].mxu0 %v1233
    %v1269 = vpop.f32.mrb[0].mxu0
    %v1270 = vadd.f32 0.0, %v1269
    %v1271 = vpop.f32.mrb[0].mxu0
    %v1272 = vpop.f32.mrb[0].mxu0
    %v1273 = vadd.f32 0.0, %v1272
    %v1274 = vpop.f32.mrb[0].mxu0
    %1275 = vdwg.mxu0
    %v1276 = vpack.c.bf16 %v965, %v962
    %v1277 = vpack.c.bf16 %v1009, %v1006
    %v1278 = vpack.c.bf16 %v1053, %v1050
    %v1279 = vpack.c.bf16 %v1097, %v1094
    %v1280 = vpack.c.bf16 %v1141, %v1138
    %v1281 = vpack.c.bf16 %v1185, %v1182
    %v1282 = vpack.c.bf16 %v1229, %v1226
    %v1283 = vpack.c.bf16 %v1273, %v1270
    %1285 = vrot.lane.b32.xlu0 %v1277, 32
    %v1286 = vpop.permute.xlu0 %1285
    %1288 = vrot.lane.b32.xlu0 %v1278, 64
    %v1289 = vpop.permute.xlu0 %1288
    %1291 = vrot.lane.b32.xlu0 %v1279, 96
    %v1292 = vpop.permute.xlu0 %1291
    %v1295 = vsel %vm386, %v1276, %v1286
    %vm1296 = vcmask 523264
    %v1298 = vsel %vm1296, %v1295, %v1289
    %vm1299 = vcmask 785408
    %v1301 = vsel %vm1299, %v1298, %v1292
    %1304 = vrot.lane.b32.xlu0 %v1281, 32
    %v1305 = vpop.permute.xlu0 %1304
    %1307 = vrot.lane.b32.xlu0 %v1282, 64
    %v1308 = vpop.permute.xlu0 %1307
    %1310 = vrot.lane.b32.xlu0 %v1283, 96
    %v1311 = vpop.permute.xlu0 %1310
    %v1314 = vsel %vm386, %v1280, %v1305
    %v1316 = vsel %vm1296, %v1314, %v1308
    %v1318 = vsel %vm1299, %v1316, %v1311
    %v1320 = vld [vmem:[#allocation7] sm:$0xf]
    %v1321 = vld [vmem:[#allocation7 + $0x4] sm:$0xf]
    %v1322 = vld [vmem:[#allocation7 + $0x8] sm:$0xf]
    %v1323 = vld [vmem:[#allocation7 + $0xc] sm:$0xf]
    %v1324 = vld [vmem:[#allocation7 + $0x10] sm:$0xf]
    %v1325 = vld [vmem:[#allocation7 + $0x14] sm:$0xf]
    %v1326 = vld [vmem:[#allocation7 + $0x18] sm:$0xf]
    %v1327 = vld [vmem:[#allocation7 + $0x1c] sm:$0xf]
    %v1328 = vld [vmem:[#allocation7 + $0x20] sm:$0xf]
    %v1329 = vld [vmem:[#allocation7 + $0x24] sm:$0xf]
    %v1330 = vld [vmem:[#allocation7 + $0x28] sm:$0xf]
    %v1331 = vld [vmem:[#allocation7 + $0x2c] sm:$0xf]
    %v1332 = vld [vmem:[#allocation7 + $0x30] sm:$0xf]
    %v1333 = vld [vmem:[#allocation7 + $0x34] sm:$0xf]
    %v1334 = vld [vmem:[#allocation7 + $0x38] sm:$0xf]
    %v1335 = vld [vmem:[#allocation7 + $0x3c] sm:$0xf]
    %v1336 = vld [vmem:[%s4] sm:$0x1]
    %v1338 = vlaneseq
    %v1339 = vshrl.u32 %v1338, 7
    %v1340 = vsub.s32 0, %v1339
    %v1341 = vrot.slane %v1336, %v1340
    %v1359 = vunpack.c.l.b16 %v1320
    %v1360 = vunpack.c.l.b16 %v1321
    %v1361 = vunpack.c.l.b16 %v1322
    %v1362 = vunpack.c.l.b16 %v1323
    %v1363 = vunpack.c.l.b16 %v1324
    %v1364 = vunpack.c.l.b16 %v1325
    %v1365 = vunpack.c.l.b16 %v1326
    %v1366 = vunpack.c.l.b16 %v1327
    %v1367 = vunpack.c.l.b16 %v1328
    %v1368 = vunpack.c.l.b16 %v1329
    %v1369 = vunpack.c.l.b16 %v1330
    %v1370 = vunpack.c.l.b16 %v1331
    %v1371 = vunpack.c.l.b16 %v1332
    %v1372 = vunpack.c.l.b16 %v1333
    %v1373 = vunpack.c.l.b16 %v1334
    %v1374 = vunpack.c.l.b16 %v1335
    %v1375 = vpack.c.b16 %v1360, %v1359
    %v1376 = vpack.c.b16 %v1362, %v1361
    %v1377 = vpack.c.b16 %v1364, %v1363
    %v1378 = vpack.c.b16 %v1366, %v1365
    %v1379 = vpack.c.b16 %v1368, %v1367
    %v1380 = vpack.c.b16 %v1370, %v1369
    %v1381 = vpack.c.b16 %v1372, %v1371
    %v1382 = vpack.c.b16 %v1374, %v1373
    %1391 = vmatprep.subr.bf16.mxu0 0
    %1392 = vmatpush1.bf16.msra.mxu0 %v1375
    %1393 = vmatprep.subr.bf16.mxu0 0
    %1394 = vmatpush1.bf16.msra.mxu0 %v1376
    %1395 = vmatprep.subr.bf16.mxu0 0
    %1396 = vmatpush1.bf16.msra.mxu0 %v1377
    %1397 = vmatprep.subr.bf16.mxu0 0
    %1398 = vmatpush1.bf16.msra.mxu0 %v1378
    %1399 = vmatprep.subr.bf16.mxu0 0
    %1400 = vmatpush1.bf16.msra.mxu0 %v1379
    %1401 = vmatprep.subr.bf16.mxu0 0
    %1402 = vmatpush1.bf16.msra.mxu0 %v1380
    %1403 = vmatprep.subr.bf16.mxu0 0
    %1404 = vmatpush1.bf16.msra.mxu0 %v1381
    %1405 = vmatprep.subr.bf16.mxu0 0
    %1406 = vmatpush1.bf16.msra.mxu0 %v1382
    %1407 = vmatprep.subr.bf16.mxu0 0
    %1408 = vmatpush1.bf16.msra.mxu0 0
    %1409 = vmatprep.subr.bf16.mxu0 0
    %1410 = vmatpush1.bf16.msra.mxu0 0
    %1411 = vmatprep.subr.bf16.mxu0 0
    %1412 = vmatpush1.bf16.msra.mxu0 0
    %1413 = vmatprep.subr.bf16.mxu0 0
    %1414 = vmatpush1.bf16.msra.mxu0 0
    %1415 = vmatprep.subr.bf16.mxu0 0
    %1416 = vmatpush1.bf16.msra.mxu0 0
    %1417 = vmatprep.subr.bf16.mxu0 0
    %1418 = vmatpush1.bf16.msra.mxu0 0
    %1419 = vmatprep.subr.bf16.mxu0 0
    %1420 = vmatpush1.bf16.msra.mxu0 0
    %1421 = vmatprep.subr.bf16.mxu0 0
    %1422 = vmatpush1.bf16.msra.mxu0 0
    %1423 = vmatprep.mubr.bf16.mxu0 0
    %1424 = vmatmul.mubr.bf16.gmra.mrb[0].mxu0 %v1301
    %v1425 = vpop.f32.mrb[0].mxu0
    %v1426 = vadd.f32 %v1341, %v1425
    %v1427 = vpop.f32.mrb[0].mxu0
    %v1428 = vpop.f32.mrb[0].mxu0
    %v1429 = vadd.f32 %v1341, %v1428
    %v1430 = vpop.f32.mrb[0].mxu0
    %1431 = vmatprep.mubr.bf16.mxu0 0
    %1432 = vmatmul.mubr.bf16.gmra.mrb[0].mxu0 %v1318
    %v1433 = vpop.f32.mrb[0].mxu0
    %v1434 = vadd.f32 %v1341, %v1433
    %v1435 = vpop.f32.mrb[0].mxu0
    %v1436 = vpop.f32.mrb[0].mxu0
    %v1437 = vadd.f32 %v1341, %v1436
    %v1438 = vpop.f32.mrb[0].mxu0
    %1439 = vdwg.mxu0
    %v1440 = vadd.f32 %v114, %v1426
    %v1441 = vadd.f32 %v115, %v1429
    %v1442 = vadd.f32 %v116, %v1434
    %v1443 = vadd.f32 %v117, %v1437
    %v1444 = vld [vmem:[%s7] sm:$0x1]
    %v1445 = vld [vmem:[%s8] sm:$0x1]
    %1446 = vadd.xlane.f32.xlu0 %v1440
    %v1447 = vpop.xlane.xlu0 %1446
    %1448 = vadd.xlane.f32.xlu0 %v1441
    %v1449 = vpop.xlane.xlu0 %1448
    %1450 = vadd.xlane.f32.xlu0 %v1442
    %v1451 = vpop.xlane.xlu0 %1450
    %1452 = vadd.xlane.f32.xlu0 %v1443
    %v1453 = vpop.xlane.xlu0 %1452
    %v1454 = vmul.f32 %v1447, %v128
    %v1455 = vmul.f32 %v1449, %v128
    %v1456 = vmul.f32 %v1451, %v128
    %v1457 = vmul.f32 %v1453, %v128
    %v1458 = vsub.f32 %v1440, %v1454
    %v1459 = vsub.f32 %v1441, %v1455
    %v1460 = vsub.f32 %v1442, %v1456
    %v1461 = vsub.f32 %v1443, %v1457
    %v1462 = vmul.f32 %v1458, %v1458
    %v1463 = vmul.f32 %v1459, %v1459
    %v1464 = vmul.f32 %v1460, %v1460
    %v1465 = vmul.f32 %v1461, %v1461
    %1466 = vadd.xlane.f32.xlu0 %v1462
    %v1467 = vpop.xlane.xlu0 %1466
    %1468 = vadd.xlane.f32.xlu0 %v1463
    %v1469 = vpop.xlane.xlu0 %1468
    %1470 = vadd.xlane.f32.xlu0 %v1464
    %v1471 = vpop.xlane.xlu0 %1470
    %1472 = vadd.xlane.f32.xlu0 %v1465
    %v1473 = vpop.xlane.xlu0 %1472
    %v1474 = vmul.f32 %v1467, %v128
    %v1475 = vmul.f32 %v1469, %v128
    %v1476 = vmul.f32 %v1471, %v128
    %v1477 = vmul.f32 %v1473, %v128
    %v1478 = vadd.f32 %v1474, 1e-05
    %v1479 = vadd.f32 %v1475, 1e-05
    %v1480 = vadd.f32 %v1476, 1e-05
    %v1481 = vadd.f32 %v1477, 1e-05
    %v1482 = vrsqrt.pop %v1478
    %v1483 = vrsqrt.pop %v1479
    %v1484 = vrsqrt.pop %v1480
    %v1485 = vrsqrt.pop %v1481
    %v1486 = vmul.f32 %v1458, %v1482
    %v1487 = vmul.f32 %v1459, %v1483
    %v1488 = vmul.f32 %v1460, %v1484
    %v1489 = vmul.f32 %v1461, %v1485
    %v1491 = vlaneseq
    %v1492 = vshrl.u32 %v1491, 7
    %v1493 = vsub.s32 0, %v1492
    %v1494 = vrot.slane %v1444, %v1493
    %v1496 = vmul.f32 %v1486, %v1494
    %v1497 = vmul.f32 %v1487, %v1494
    %v1498 = vmul.f32 %v1488, %v1494
    %v1499 = vmul.f32 %v1489, %v1494
    %v1501 = vlaneseq
    %v1502 = vshrl.u32 %v1501, 7
    %v1503 = vsub.s32 0, %v1502
    %v1504 = vrot.slane %v1445, %v1503
    %v1506 = vadd.f32 %v1496, %v1504
    %v1507 = vadd.f32 %v1497, %v1504
    %v1508 = vadd.f32 %v1498, %v1504
    %v1509 = vadd.f32 %v1499, %v1504
    %v1510 = vpack.c.bf16 %v1507, %v1506
    %v1511 = vpack.c.bf16 %v1509, %v1508
    %v1512 = vld [vmem:[#allocation8] sm:$0xff]
    %v1513 = vld [vmem:[#allocation8 + $0x8] sm:$0xff]
    %v1514 = vld [vmem:[#allocation8 + $0x10] sm:$0xff]
    %v1515 = vld [vmem:[#allocation8 + $0x18] sm:$0xff]
    %v1516 = vld [vmem:[#allocation8 + $0x20] sm:$0xff]
    %v1517 = vld [vmem:[#allocation8 + $0x28] sm:$0xff]
    %v1518 = vld [vmem:[#allocation8 + $0x30] sm:$0xff]
    %v1519 = vld [vmem:[#allocation8 + $0x38] sm:$0xff]
    %v1520 = vld [vmem:[#allocation8 + $0x40] sm:$0xff]
    %v1521 = vld [vmem:[#allocation8 + $0x48] sm:$0xff]
    %v1522 = vld [vmem:[#allocation8 + $0x50] sm:$0xff]
    %v1523 = vld [vmem:[#allocation8 + $0x58] sm:$0xff]
    %v1524 = vld [vmem:[#allocation8 + $0x60] sm:$0xff]
    %v1525 = vld [vmem:[#allocation8 + $0x68] sm:$0xff]
    %v1526 = vld [vmem:[#allocation8 + $0x70] sm:$0xff]
    %v1527 = vld [vmem:[#allocation8 + $0x78] sm:$0xff]
    %v1528 = vld [vmem:[#allocation8 + $0x80] sm:$0xff]
    %v1529 = vld [vmem:[#allocation8 + $0x88] sm:$0xff]
    %v1530 = vld [vmem:[#allocation8 + $0x90] sm:$0xff]
    %v1531 = vld [vmem:[#allocation8 + $0x98] sm:$0xff]
    %v1532 = vld [vmem:[#allocation8 + $0xa0] sm:$0xff]
    %v1533 = vld [vmem:[#allocation8 + $0xa8] sm:$0xff]
    %v1534 = vld [vmem:[#allocation8 + $0xb0] sm:$0xff]
    %v1535 = vld [vmem:[#allocation8 + $0xb8] sm:$0xff]
    %v1536 = vld [vmem:[#allocation8 + $0xc0] sm:$0xff]
    %v1537 = vld [vmem:[#allocation8 + $0xc8] sm:$0xff]
    %v1538 = vld [vmem:[#allocation8 + $0xd0] sm:$0xff]
    %v1539 = vld [vmem:[#allocation8 + $0xd8] sm:$0xff]
    %v1540 = vld [vmem:[#allocation8 + $0xe0] sm:$0xff]
    %v1541 = vld [vmem:[#allocation8 + $0xe8] sm:$0xff]
    %v1542 = vld [vmem:[#allocation8 + $0xf0] sm:$0xff]
    %v1543 = vld [vmem:[#allocation8 + $0xf8] sm:$0xff]
    %v1544 = vld [vmem:[%s10] sm:$0xf]
    %v1546 = vlaneseq
    %v1547 = vshrl.u32 %v1546, 7
    %v1548 = vsub.s32 0, %v1547
    %v1549 = vrot.slane %v1544, %v1548
    %v1550 = vlaneseq
    %v1551 = vshrl.u32 %v1550, 7
    %v1552 = vsub.s32 1, %v1551
    %v1553 = vrot.slane %v1544, %v1552
    %v1554 = vlaneseq
    %v1555 = vshrl.u32 %v1554, 7
    %v1556 = vsub.s32 2, %v1555
    %v1557 = vrot.slane %v1544, %v1556
    %v1558 = vlaneseq
    %v1559 = vshrl.u32 %v1558, 7
    %v1560 = vsub.s32 3, %v1559
    %v1561 = vrot.slane %v1544, %v1560
    %v1598 = vunpack.c.l.b16 %v1512
    %v1599 = vunpack.c.h.b16 %v1512
    %v1600 = vunpack.c.l.b16 %v1513
    %v1601 = vunpack.c.h.b16 %v1513
    %v1602 = vunpack.c.l.b16 %v1514
    %v1603 = vunpack.c.h.b16 %v1514
    %v1604 = vunpack.c.l.b16 %v1515
    %v1605 = vunpack.c.h.b16 %v1515
    %v1606 = vunpack.c.l.b16 %v1516
    %v1607 = vunpack.c.h.b16 %v1516
    %v1608 = vunpack.c.l.b16 %v1517
    %v1609 = vunpack.c.h.b16 %v1517
    %v1610 = vunpack.c.l.b16 %v1518
    %v1611 = vunpack.c.h.b16 %v1518
    %v1612 = vunpack.c.l.b16 %v1519
    %v1613 = vunpack.c.h.b16 %v1519
    %v1614 = vunpack.c.l.b16 %v1520
    %v1615 = vunpack.c.h.b16 %v1520
    %v1616 = vunpack.c.l.b16 %v1521
    %v1617 = vunpack.c.h.b16 %v1521
    %v1618 = vunpack.c.l.b16 %v1522
    %v1619 = vunpack.c.h.b16 %v1522
    %v1620 = vunpack.c.l.b16 %v1523
    %v1621 = vunpack.c.h.b16 %v1523
    %v1622 = vunpack.c.l.b16 %v1524
    %v1623 = vunpack.c.h.b16 %v1524
    %v1624 = vunpack.c.l.b16 %v1525
    %v1625 = vunpack.c.h.b16 %v1525
    %v1626 = vunpack.c.l.b16 %v1526
    %v1627 = vunpack.c.h.b16 %v1526
    %v1628 = vunpack.c.l.b16 %v1527
    %v1629 = vunpack.c.h.b16 %v1527
    %v1630 = vunpack.c.l.b16 %v1528
    %v1631 = vunpack.c.h.b16 %v1528
    %v1632 = vunpack.c.l.b16 %v1529
    %v1633 = vunpack.c.h.b16 %v1529
    %v1634 = vunpack.c.l.b16 %v1530
    %v1635 = vunpack.c.h.b16 %v1530
    %v1636 = vunpack.c.l.b16 %v1531
    %v1637 = vunpack.c.h.b16 %v1531
    %v1638 = vunpack.c.l.b16 %v1532
    %v1639 = vunpack.c.h.b16 %v1532
    %v1640 = vunpack.c.l.b16 %v1533
    %v1641 = vunpack.c.h.b16 %v1533
    %v1642 = vunpack.c.l.b16 %v1534
    %v1643 = vunpack.c.h.b16 %v1534
    %v1644 = vunpack.c.l.b16 %v1535
    %v1645 = vunpack.c.h.b16 %v1535
    %v1646 = vunpack.c.l.b16 %v1536
    %v1647 = vunpack.c.h.b16 %v1536
    %v1648 = vunpack.c.l.b16 %v1537
    %v1649 = vunpack.c.h.b16 %v1537
    %v1650 = vunpack.c.l.b16 %v1538
    %v1651 = vunpack.c.h.b16 %v1538
    %v1652 = vunpack.c.l.b16 %v1539
    %v1653 = vunpack.c.h.b16 %v1539
    %v1654 = vunpack.c.l.b16 %v1540
    %v1655 = vunpack.c.h.b16 %v1540
    %v1656 = vunpack.c.l.b16 %v1541
    %v1657 = vunpack.c.h.b16 %v1541
    %v1658 = vunpack.c.l.b16 %v1542
    %v1659 = vunpack.c.h.b16 %v1542
    %v1660 = vunpack.c.l.b16 %v1543
    %v1661 = vunpack.c.h.b16 %v1543
    %v1662 = vpack.c.b16 %v1602, %v1598
    %v1663 = vpack.c.b16 %v1603, %v1599
    %v1664 = vpack.c.b16 %v1604, %v1600
    %v1665 = vpack.c.b16 %v1605, %v1601
    %v1666 = vpack.c.b16 %v1610, %v1606
    %v1667 = vpack.c.b16 %v1611, %v1607
    %v1668 = vpack.c.b16 %v1612, %v1608
    %v1669 = vpack.c.b16 %v1613, %v1609
    %v1670 = vpack.c.b16 %v1618, %v1614
    %v1671 = vpack.c.b16 %v1619, %v1615
    %v1672 = vpack.c.b16 %v1620, %v1616
    %v1673 = vpack.c.b16 %v1621, %v1617
    %v1674 = vpack.c.b16 %v1626, %v1622
    %v1675 = vpack.c.b16 %v1627, %v1623
    %v1676 = vpack.c.b16 %v1628, %v1624
    %v1677 = vpack.c.b16 %v1629, %v1625
    %v1678 = vpack.c.b16 %v1634, %v1630
    %v1679 = vpack.c.b16 %v1635, %v1631
    %v1680 = vpack.c.b16 %v1636, %v1632
    %v1681 = vpack.c.b16 %v1637, %v1633
    %v1682 = vpack.c.b16 %v1642, %v1638
    %v1683 = vpack.c.b16 %v1643, %v1639
    %v1684 = vpack.c.b16 %v1644, %v1640
    %v1685 = vpack.c.b16 %v1645, %v1641
    %v1686 = vpack.c.b16 %v1650, %v1646
    %v1687 = vpack.c.b16 %v1651, %v1647
    %v1688 = vpack.c.b16 %v1652, %v1648
    %v1689 = vpack.c.b16 %v1653, %v1649
    %v1690 = vpack.c.b16 %v1658, %v1654
    %v1691 = vpack.c.b16 %v1659, %v1655
    %v1692 = vpack.c.b16 %v1660, %v1656
    %v1693 = vpack.c.b16 %v1661, %v1657
    %1726 = vmatprep.subr.bf16.mxu0 %v1663
    %1727 = vmatpush1.bf16.msra.mxu0 %v1662
    %1728 = vmatprep.subr.bf16.mxu0 %v1667
    %1729 = vmatpush1.bf16.msra.mxu0 %v1666
    %1730 = vmatprep.subr.bf16.mxu0 %v1671
    %1731 = vmatpush1.bf16.msra.mxu0 %v1670
    %1732 = vmatprep.subr.bf16.mxu0 %v1675
    %1733 = vmatpush1.bf16.msra.mxu0 %v1674
    %1734 = vmatprep.subr.bf16.mxu0 %v1679
    %1735 = vmatpush1.bf16.msra.mxu0 %v1678
    %1736 = vmatprep.subr.bf16.mxu0 %v1683
    %1737 = vmatpush1.bf16.msra.mxu0 %v1682
    %1738 = vmatprep.subr.bf16.mxu0 %v1687
    %1739 = vmatpush1.bf16.msra.mxu0 %v1686
    %1740 = vmatprep.subr.bf16.mxu0 %v1691
    %1741 = vmatpush1.bf16.msra.mxu0 %v1690
    %1742 = vmatprep.subr.bf16.mxu0 0
    %1743 = vmatpush1.bf16.msra.mxu0 0
    %1744 = vmatprep.subr.bf16.mxu0 0
    %1745 = vmatpush1.bf16.msra.mxu0 0
    %1746 = vmatprep.subr.bf16.mxu0 0
    %1747 = vmatpush1.bf16.msra.mxu0 0
    %1748 = vmatprep.subr.bf16.mxu0 0
    %1749 = vmatpush1.bf16.msra.mxu0 0
    %1750 = vmatprep.subr.bf16.mxu0 0
    %1751 = vmatpush1.bf16.msra.mxu0 0
    %1752 = vmatprep.subr.bf16.mxu0 0
    %1753 = vmatpush1.bf16.msra.mxu0 0
    %1754 = vmatprep.subr.bf16.mxu0 0
    %1755 = vmatpush1.bf16.msra.mxu0 0
    %1756 = vmatprep.subr.bf16.mxu0 0
    %1757 = vmatpush1.bf16.msra.mxu0 0
    %1758 = vmatprep.mubr.bf16.mxu0 0
    %1759 = vmatmul.mubr.bf16.gmra.mrb[0].mxu0 %v1510
    %v1760 = vpop.f32.mrb[0].mxu0
    %v1761 = vadd.f32 %v1549, %v1760
    %v1762 = vpop.f32.mrb[0].mxu0
    %v1763 = vadd.f32 %v1553, %v1762
    %v1764 = vpop.f32.mrb[0].mxu0
    %v1765 = vadd.f32 %v1549, %v1764
    %v1766 = vpop.f32.mrb[0].mxu0
    %v1767 = vadd.f32 %v1553, %v1766
    %1768 = vmatprep.mubr.bf16.mxu0 0
    %1769 = vmatmul.mubr.bf16.gmra.mrb[0].mxu0 %v1511
    %v1770 = vpop.f32.mrb[0].mxu0
    %v1771 = vadd.f32 %v1549, %v1770
    %v1772 = vpop.f32.mrb[0].mxu0
    %v1773 = vadd.f32 %v1553, %v1772
    %v1774 = vpop.f32.mrb[0].mxu0
    %v1775 = vadd.f32 %v1549, %v1774
    %v1776 = vpop.f32.mrb[0].mxu0
    %v1777 = vadd.f32 %v1553, %v1776
    %1778 = vdwg.mxu0
    %1779 = vmatprep.subr.bf16.mxu0 %v1665
    %1780 = vmatpush1.bf16.msra.mxu0 %v1664
    %1781 = vmatprep.subr.bf16.mxu0 %v1669
    %1782 = vmatpush1.bf16.msra.mxu0 %v1668
    %1783 = vmatprep.subr.bf16.mxu0 %v1673
    %1784 = vmatpush1.bf16.msra.mxu0 %v1672
    %1785 = vmatprep.subr.bf16.mxu0 %v1677
    %1786 = vmatpush1.bf16.msra.mxu0 %v1676
    %1787 = vmatprep.subr.bf16.mxu0 %v1681
    %1788 = vmatpush1.bf16.msra.mxu0 %v1680
    %1789 = vmatprep.subr.bf16.mxu0 %v1685
    %1790 = vmatpush1.bf16.msra.mxu0 %v1684
    %1791 = vmatprep.subr.bf16.mxu0 %v1689
    %1792 = vmatpush1.bf16.msra.mxu0 %v1688
    %1793 = vmatprep.subr.bf16.mxu0 %v1693
    %1794 = vmatpush1.bf16.msra.mxu0 %v1692
    %1795 = vmatprep.subr.bf16.mxu0 0
    %1796 = vmatpush1.bf16.msra.mxu0 0
    %1797 = vmatprep.subr.bf16.mxu0 0
    %1798 = vmatpush1.bf16.msra.mxu0 0
    %1799 = vmatprep.subr.bf16.mxu0 0
    %1800 = vmatpush1.bf16.msra.mxu0 0
    %1801 = vmatprep.subr.bf16.mxu0 0
    %1802 = vmatpush1.bf16.msra.mxu0 0
    %1803 = vmatprep.subr.bf16.mxu0 0
    %1804 = vmatpush1.bf16.msra.mxu0 0
    %1805 = vmatprep.subr.bf16.mxu0 0
    %1806 = vmatpush1.bf16.msra.mxu0 0
    %1807 = vmatprep.subr.bf16.mxu0 0
    %1808 = vmatpush1.bf16.msra.mxu0 0
    %1809 = vmatprep.subr.bf16.mxu0 0
    %1810 = vmatpush1.bf16.msra.mxu0 0
    %1811 = vmatprep.mubr.bf16.mxu0 0
    %1812 = vmatmul.mubr.bf16.gmra.mrb[0].mxu0 %v1510
    %v1813 = vpop.f32.mrb[0].mxu0
    %v1814 = vadd.f32 %v1557, %v1813
    %v1815 = vpop.f32.mrb[0].mxu0
    %v1816 = vadd.f32 %v1561, %v1815
    %v1817 = vpop.f32.mrb[0].mxu0
    %v1818 = vadd.f32 %v1557, %v1817
    %v1819 = vpop.f32.mrb[0].mxu0
    %v1820 = vadd.f32 %v1561, %v1819
    %1821 = vmatprep.mubr.bf16.mxu0 0
    %1822 = vmatmul.mubr.bf16.gmra.mrb[0].mxu0 %v1511
    %v1823 = vpop.f32.mrb[0].mxu0
    %v1824 = vadd.f32 %v1557, %v1823
    %v1825 = vpop.f32.mrb[0].mxu0
    %v1826 = vadd.f32 %v1561, %v1825
    %v1827 = vpop.f32.mrb[0].mxu0
    %v1828 = vadd.f32 %v1557, %v1827
    %v1829 = vpop.f32.mrb[0].mxu0
    %v1830 = vadd.f32 %v1561, %v1829
    %1831 = vdwg.mxu0
    %v1832 = vmul.f32 %v1761, 0.5
    %v1833 = vmul.f32 %v1763, 0.5
    %v1834 = vmul.f32 %v1814, 0.5
    %v1835 = vmul.f32 %v1816, 0.5
    %v1836 = vmul.f32 %v1765, 0.5
    %v1837 = vmul.f32 %v1767, 0.5
    %v1838 = vmul.f32 %v1818, 0.5
    %v1839 = vmul.f32 %v1820, 0.5
    %v1840 = vmul.f32 %v1771, 0.5
    %v1841 = vmul.f32 %v1773, 0.5
    %v1842 = vmul.f32 %v1824, 0.5
    %v1843 = vmul.f32 %v1826, 0.5
    %v1844 = vmul.f32 %v1775, 0.5
    %v1845 = vmul.f32 %v1777, 0.5
    %v1846 = vmul.f32 %v1828, 0.5
    %v1847 = vmul.f32 %v1830, 0.5
    %v1848 = vmul.f32 %v1761, %v1761
    %v1849 = vmul.f32 %v1763, %v1763
    %v1850 = vmul.f32 %v1814, %v1814
    %v1851 = vmul.f32 %v1816, %v1816
    %v1852 = vmul.f32 %v1765, %v1765
    %v1853 = vmul.f32 %v1767, %v1767
    %v1854 = vmul.f32 %v1818, %v1818
    %v1855 = vmul.f32 %v1820, %v1820
    %v1856 = vmul.f32 %v1771, %v1771
    %v1857 = vmul.f32 %v1773, %v1773
    %v1858 = vmul.f32 %v1824, %v1824
    %v1859 = vmul.f32 %v1826, %v1826
    %v1860 = vmul.f32 %v1775, %v1775
    %v1861 = vmul.f32 %v1777, %v1777
    %v1862 = vmul.f32 %v1828, %v1828
    %v1863 = vmul.f32 %v1830, %v1830
    %v1864 = vmul.f32 %v1848, %v1761
    %v1865 = vmul.f32 %v1849, %v1763
    %v1866 = vmul.f32 %v1850, %v1814
    %v1867 = vmul.f32 %v1851, %v1816
    %v1868 = vmul.f32 %v1852, %v1765
    %v1869 = vmul.f32 %v1853, %v1767
    %v1870 = vmul.f32 %v1854, %v1818
    %v1871 = vmul.f32 %v1855, %v1820
    %v1872 = vmul.f32 %v1856, %v1771
    %v1873 = vmul.f32 %v1857, %v1773
    %v1874 = vmul.f32 %v1858, %v1824
    %v1875 = vmul.f32 %v1859, %v1826
    %v1876 = vmul.f32 %v1860, %v1775
    %v1877 = vmul.f32 %v1861, %v1777
    %v1878 = vmul.f32 %v1862, %v1828
    %v1879 = vmul.f32 %v1863, %v1830
    %v1880 = vmul.f32 %v1864, 0.044715
    %v1881 = vmul.f32 %v1865, 0.044715
    %v1882 = vmul.f32 %v1866, 0.044715
    %v1883 = vmul.f32 %v1867, 0.044715
    %v1884 = vmul.f32 %v1868, 0.044715
    %v1885 = vmul.f32 %v1869, 0.044715
    %v1886 = vmul.f32 %v1870, 0.044715
    %v1887 = vmul.f32 %v1871, 0.044715
    %v1888 = vmul.f32 %v1872, 0.044715
    %v1889 = vmul.f32 %v1873, 0.044715
    %v1890 = vmul.f32 %v1874, 0.044715
    %v1891 = vmul.f32 %v1875, 0.044715
    %v1892 = vmul.f32 %v1876, 0.044715
    %v1893 = vmul.f32 %v1877, 0.044715
    %v1894 = vmul.f32 %v1878, 0.044715
    %v1895 = vmul.f32 %v1879, 0.044715
    %v1896 = vadd.f32 %v1761, %v1880
    %v1897 = vadd.f32 %v1763, %v1881
    %v1898 = vadd.f32 %v1814, %v1882
    %v1899 = vadd.f32 %v1816, %v1883
    %v1900 = vadd.f32 %v1765, %v1884
    %v1901 = vadd.f32 %v1767, %v1885
    %v1902 = vadd.f32 %v1818, %v1886
    %v1903 = vadd.f32 %v1820, %v1887
    %v1904 = vadd.f32 %v1771, %v1888
    %v1905 = vadd.f32 %v1773, %v1889
    %v1906 = vadd.f32 %v1824, %v1890
    %v1907 = vadd.f32 %v1826, %v1891
    %v1908 = vadd.f32 %v1775, %v1892
    %v1909 = vadd.f32 %v1777, %v1893
    %v1910 = vadd.f32 %v1828, %v1894
    %v1911 = vadd.f32 %v1830, %v1895
    %v1912 = vmul.f32 %v1896, 0.7978846
    %v1913 = vmul.f32 %v1897, 0.7978846
    %v1914 = vmul.f32 %v1898, 0.7978846
    %v1915 = vmul.f32 %v1899, 0.7978846
    %v1916 = vmul.f32 %v1900, 0.7978846
    %v1917 = vmul.f32 %v1901, 0.7978846
    %v1918 = vmul.f32 %v1902, 0.7978846
    %v1919 = vmul.f32 %v1903, 0.7978846
    %v1920 = vmul.f32 %v1904, 0.7978846
    %v1921 = vmul.f32 %v1905, 0.7978846
    %v1922 = vmul.f32 %v1906, 0.7978846
    %v1923 = vmul.f32 %v1907, 0.7978846
    %v1924 = vmul.f32 %v1908, 0.7978846
    %v1925 = vmul.f32 %v1909, 0.7978846
    %v1926 = vmul.f32 %v1910, 0.7978846
    %v1927 = vmul.f32 %v1911, 0.7978846
    %v1928 = vtanh.pop %v1912
    %v1929 = vtanh.pop %v1913
    %v1930 = vtanh.pop %v1914
    %v1931 = vtanh.pop %v1915
    %v1932 = vtanh.pop %v1916
    %v1933 = vtanh.pop %v1917
    %v1934 = vtanh.pop %v1918
    %v1935 = vtanh.pop %v1919
    %v1936 = vtanh.pop %v1920
    %v1937 = vtanh.pop %v1921
    %v1938 = vtanh.pop %v1922
    %v1939 = vtanh.pop %v1923
    %v1940 = vtanh.pop %v1924
    %v1941 = vtanh.pop %v1925
    %v1942 = vtanh.pop %v1926
    %v1943 = vtanh.pop %v1927
    %v1944 = vadd.f32 %v1928, 1.0
    %v1945 = vadd.f32 %v1929, 1.0
    %v1946 = vadd.f32 %v1930, 1.0
    %v1947 = vadd.f32 %v1931, 1.0
    %v1948 = vadd.f32 %v1932, 1.0
    %v1949 = vadd.f32 %v1933, 1.0
    %v1950 = vadd.f32 %v1934, 1.0
    %v1951 = vadd.f32 %v1935, 1.0
    %v1952 = vadd.f32 %v1936, 1.0
    %v1953 = vadd.f32 %v1937, 1.0
    %v1954 = vadd.f32 %v1938, 1.0
    %v1955 = vadd.f32 %v1939, 1.0
    %v1956 = vadd.f32 %v1940, 1.0
    %v1957 = vadd.f32 %v1941, 1.0
    %v1958 = vadd.f32 %v1942, 1.0
    %v1959 = vadd.f32 %v1943, 1.0
    %v1960 = vmul.f32 %v1832, %v1944
    %v1961 = vmul.f32 %v1833, %v1945
    %v1962 = vmul.f32 %v1834, %v1946
    %v1963 = vmul.f32 %v1835, %v1947
    %v1964 = vmul.f32 %v1836, %v1948
    %v1965 = vmul.f32 %v1837, %v1949
    %v1966 = vmul.f32 %v1838, %v1950
    %v1967 = vmul.f32 %v1839, %v1951
    %v1968 = vmul.f32 %v1840, %v1952
    %v1969 = vmul.f32 %v1841, %v1953
    %v1970 = vmul.f32 %v1842, %v1954
    %v1971 = vmul.f32 %v1843, %v1955
    %v1972 = vmul.f32 %v1844, %v1956
    %v1973 = vmul.f32 %v1845, %v1957
    %v1974 = vmul.f32 %v1846, %v1958
    %v1975 = vmul.f32 %v1847, %v1959
    %v1976 = vpack.c.bf16 %v1964, %v1960
    %v1977 = vpack.c.bf16 %v1965, %v1961
    %v1978 = vpack.c.bf16 %v1966, %v1962
    %v1979 = vpack.c.bf16 %v1967, %v1963
    %v1980 = vpack.c.bf16 %v1972, %v1968
    %v1981 = vpack.c.bf16 %v1973, %v1969
    %v1982 = vpack.c.bf16 %v1974, %v1970
    %v1983 = vpack.c.bf16 %v1975, %v1971
    %v1984 = vld [vmem:[#allocation10] sm:$0xf]
    %v1985 = vld [vmem:[#allocation10 + $0x4] sm:$0xf]
    %v1986 = vld [vmem:[#allocation10 + $0x8] sm:$0xf]
    %v1987 = vld [vmem:[#allocation10 + $0xc] sm:$0xf]
    %v1988 = vld [vmem:[#allocation10 + $0x10] sm:$0xf]
    %v1989 = vld [vmem:[#allocation10 + $0x14] sm:$0xf]
    %v1990 = vld [vmem:[#allocation10 + $0x18] sm:$0xf]
    %v1991 = vld [vmem:[#allocation10 + $0x1c] sm:$0xf]
    %v1992 = vld [vmem:[#allocation10 + $0x20] sm:$0xf]
    %v1993 = vld [vmem:[#allocation10 + $0x24] sm:$0xf]
    %v1994 = vld [vmem:[#allocation10 + $0x28] sm:$0xf]
    %v1995 = vld [vmem:[#allocation10 + $0x2c] sm:$0xf]
    %v1996 = vld [vmem:[#allocation10 + $0x30] sm:$0xf]
    %v1997 = vld [vmem:[#allocation10 + $0x34] sm:$0xf]
    %v1998 = vld [vmem:[#allocation10 + $0x38] sm:$0xf]
    %v1999 = vld [vmem:[#allocation10 + $0x3c] sm:$0xf]
    %v2000 = vld [vmem:[#allocation10 + $0x40] sm:$0xf]
    %v2001 = vld [vmem:[#allocation10 + $0x44] sm:$0xf]
    %v2002 = vld [vmem:[#allocation10 + $0x48] sm:$0xf]
    %v2003 = vld [vmem:[#allocation10 + $0x4c] sm:$0xf]
    %v2004 = vld [vmem:[#allocation10 + $0x50] sm:$0xf]
    %v2005 = vld [vmem:[#allocation10 + $0x54] sm:$0xf]
    %v2006 = vld [vmem:[#allocation10 + $0x58] sm:$0xf]
    %v2007 = vld [vmem:[#allocation10 + $0x5c] sm:$0xf]
    %v2008 = vld [vmem:[#allocation10 + $0x60] sm:$0xf]
    %v2009 = vld [vmem:[#allocation10 + $0x64] sm:$0xf]
    %v2010 = vld [vmem:[#allocation10 + $0x68] sm:$0xf]
    %v2011 = vld [vmem:[#allocation10 + $0x6c] sm:$0xf]
    %v2012 = vld [vmem:[#allocation10 + $0x70] sm:$0xf]
    %v2013 = vld [vmem:[#allocation10 + $0x74] sm:$0xf]
    %v2014 = vld [vmem:[#allocation10 + $0x78] sm:$0xf]
    %v2015 = vld [vmem:[#allocation10 + $0x7c] sm:$0xf]
    %v2016 = vld [vmem:[#allocation10 + $0x80] sm:$0xf]
    %v2017 = vld [vmem:[#allocation10 + $0x84] sm:$0xf]
    %v2018 = vld [vmem:[#allocation10 + $0x88] sm:$0xf]
    %v2019 = vld [vmem:[#allocation10 + $0x8c] sm:$0xf]
    %v2020 = vld [vmem:[#allocation10 + $0x90] sm:$0xf]
    %v2021 = vld [vmem:[#allocation10 + $0x94] sm:$0xf]
    %v2022 = vld [vmem:[#allocation10 + $0x98] sm:$0xf]
    %v2023 = vld [vmem:[#allocation10 + $0x9c] sm:$0xf]
    %v2024 = vld [vmem:[#allocation10 + $0xa0] sm:$0xf]
    %v2025 = vld [vmem:[#allocation10 + $0xa4] sm:$0xf]
    %v2026 = vld [vmem:[#allocation10 + $0xa8] sm:$0xf]
    %v2027 = vld [vmem:[#allocation10 + $0xac] sm:$0xf]
    %v2028 = vld [vmem:[#allocation10 + $0xb0] sm:$0xf]
    %v2029 = vld [vmem:[#allocation10 + $0xb4] sm:$0xf]
    %v2030 = vld [vmem:[#allocation10 + $0xb8] sm:$0xf]
    %v2031 = vld [vmem:[#allocation10 + $0xbc] sm:$0xf]
    %v2032 = vld [vmem:[#allocation10 + $0xc0] sm:$0xf]
    %v2033 = vld [vmem:[#allocation10 + $0xc4] sm:$0xf]
    %v2034 = vld [vmem:[#allocation10 + $0xc8] sm:$0xf]
    %v2035 = vld [vmem:[#allocation10 + $0xcc] sm:$0xf]
    %v2036 = vld [vmem:[#allocation10 + $0xd0] sm:$0xf]
    %v2037 = vld [vmem:[#allocation10 + $0xd4] sm:$0xf]
    %v2038 = vld [vmem:[#allocation10 + $0xd8] sm:$0xf]
    %v2039 = vld [vmem:[#allocation10 + $0xdc] sm:$0xf]
    %v2040 = vld [vmem:[#allocation10 + $0xe0] sm:$0xf]
    %v2041 = vld [vmem:[#allocation10 + $0xe4] sm:$0xf]
    %v2042 = vld [vmem:[#allocation10 + $0xe8] sm:$0xf]
    %v2043 = vld [vmem:[#allocation10 + $0xec] sm:$0xf]
    %v2044 = vld [vmem:[#allocation10 + $0xf0] sm:$0xf]
    %v2045 = vld [vmem:[#allocation10 + $0xf4] sm:$0xf]
    %v2046 = vld [vmem:[#allocation10 + $0xf8] sm:$0xf]
    %v2047 = vld [vmem:[#allocation10 + $0xfc] sm:$0xf]
    %v2048 = vld [vmem:[%s12] sm:$0x1]
    %v2050 = vlaneseq
    %v2051 = vshrl.u32 %v2050, 7
    %v2052 = vsub.s32 0, %v2051
    %v2053 = vrot.slane %v2048, %v2052
    %v2119 = vunpack.c.l.b16 %v1984
    %v2120 = vunpack.c.l.b16 %v1985
    %v2121 = vunpack.c.l.b16 %v1986
    %v2122 = vunpack.c.l.b16 %v1987
    %v2123 = vunpack.c.l.b16 %v1988
    %v2124 = vunpack.c.l.b16 %v1989
    %v2125 = vunpack.c.l.b16 %v1990
    %v2126 = vunpack.c.l.b16 %v1991
    %v2127 = vunpack.c.l.b16 %v1992
    %v2128 = vunpack.c.l.b16 %v1993
    %v2129 = vunpack.c.l.b16 %v1994
    %v2130 = vunpack.c.l.b16 %v1995
    %v2131 = vunpack.c.l.b16 %v1996
    %v2132 = vunpack.c.l.b16 %v1997
    %v2133 = vunpack.c.l.b16 %v1998
    %v2134 = vunpack.c.l.b16 %v1999
    %v2135 = vunpack.c.l.b16 %v2000
    %v2136 = vunpack.c.l.b16 %v2001
    %v2137 = vunpack.c.l.b16 %v2002
    %v2138 = vunpack.c.l.b16 %v2003
    %v2139 = vunpack.c.l.b16 %v2004
    %v2140 = vunpack.c.l.b16 %v2005
    %v2141 = vunpack.c.l.b16 %v2006
    %v2142 = vunpack.c.l.b16 %v2007
    %v2143 = vunpack.c.l.b16 %v2008
    %v2144 = vunpack.c.l.b16 %v2009
    %v2145 = vunpack.c.l.b16 %v2010
    %v2146 = vunpack.c.l.b16 %v2011
    %v2147 = vunpack.c.l.b16 %v2012
    %v2148 = vunpack.c.l.b16 %v2013
    %v2149 = vunpack.c.l.b16 %v2014
    %v2150 = vunpack.c.l.b16 %v2015
    %v2151 = vunpack.c.l.b16 %v2016
    %v2152 = vunpack.c.l.b16 %v2017
    %v2153 = vunpack.c.l.b16 %v2018
    %v2154 = vunpack.c.l.b16 %v2019
    %v2155 = vunpack.c.l.b16 %v2020
    %v2156 = vunpack.c.l.b16 %v2021
    %v2157 = vunpack.c.l.b16 %v2022
    %v2158 = vunpack.c.l.b16 %v2023
    %v2159 = vunpack.c.l.b16 %v2024
    %v2160 = vunpack.c.l.b16 %v2025
    %v2161 = vunpack.c.l.b16 %v2026
    %v2162 = vunpack.c.l.b16 %v2027
    %v2163 = vunpack.c.l.b16 %v2028
    %v2164 = vunpack.c.l.b16 %v2029
    %v2165 = vunpack.c.l.b16 %v2030
    %v2166 = vunpack.c.l.b16 %v2031
    %v2167 = vunpack.c.l.b16 %v2032
    %v2168 = vunpack.c.l.b16 %v2033
    %v2169 = vunpack.c.l.b16 %v2034
    %v2170 = vunpack.c.l.b16 %v2035
    %v2171 = vunpack.c.l.b16 %v2036
    %v2172 = vunpack.c.l.b16 %v2037
    %v2173 = vunpack.c.l.b16 %v2038
    %v2174 = vunpack.c.l.b16 %v2039
    %v2175 = vunpack.c.l.b16 %v2040
    %v2176 = vunpack.c.l.b16 %v2041
    %v2177 = vunpack.c.l.b16 %v2042
    %v2178 = vunpack.c.l.b16 %v2043
    %v2179 = vunpack.c.l.b16 %v2044
    %v2180 = vunpack.c.l.b16 %v2045
    %v2181 = vunpack.c.l.b16 %v2046
    %v2182 = vunpack.c.l.b16 %v2047
    %v2183 = vpack.c.b16 %v2120, %v2119
    %v2184 = vpack.c.b16 %v2122, %v2121
    %v2185 = vpack.c.b16 %v2124, %v2123
    %v2186 = vpack.c.b16 %v2126, %v2125
    %v2187 = vpack.c.b16 %v2128, %v2127
    %v2188 = vpack.c.b16 %v2130, %v2129
    %v2189 = vpack.c.b16 %v2132, %v2131
    %v2190 = vpack.c.b16 %v2134, %v2133
    %v2191 = vpack.c.b16 %v2136, %v2135
    %v2192 = vpack.c.b16 %v2138, %v2137
    %v2193 = vpack.c.b16 %v2140, %v2139
    %v2194 = vpack.c.b16 %v2142, %v2141
    %v2195 = vpack.c.b16 %v2144, %v2143
    %v2196 = vpack.c.b16 %v2146, %v2145
    %v2197 = vpack.c.b16 %v2148, %v2147
    %v2198 = vpack.c.b16 %v2150, %v2149
    %v2199 = vpack.c.b16 %v2152, %v2151
    %v2200 = vpack.c.b16 %v2154, %v2153
    %v2201 = vpack.c.b16 %v2156, %v2155
    %v2202 = vpack.c.b16 %v2158, %v2157
    %v2203 = vpack.c.b16 %v2160, %v2159
    %v2204 = vpack.c.b16 %v2162, %v2161
    %v2205 = vpack.c.b16 %v2164, %v2163
    %v2206 = vpack.c.b16 %v2166, %v2165
    %v2207 = vpack.c.b16 %v2168, %v2167
    %v2208 = vpack.c.b16 %v2170, %v2169
    %v2209 = vpack.c.b16 %v2172, %v2171
    %v2210 = vpack.c.b16 %v2174, %v2173
    %v2211 = vpack.c.b16 %v2176, %v2175
    %v2212 = vpack.c.b16 %v2178, %v2177
    %v2213 = vpack.c.b16 %v2180, %v2179
    %v2214 = vpack.c.b16 %v2182, %v2181
    %2247 = vmatprep.subr.bf16.mxu0 0
    %2248 = vmatpush1.bf16.msra.mxu0 %v2183
    %2249 = vmatprep.subr.bf16.mxu0 0
    %2250 = vmatpush1.bf16.msra.mxu0 %v2184
    %2251 = vmatprep.subr.bf16.mxu0 0
    %2252 = vmatpush1.bf16.msra.mxu0 %v2185
    %2253 = vmatprep.subr.bf16.mxu0 0
    %2254 = vmatpush1.bf16.msra.mxu0 %v2186
    %2255 = vmatprep.subr.bf16.mxu0 0
    %2256 = vmatpush1.bf16.msra.mxu0 %v2187
    %2257 = vmatprep.subr.bf16.mxu0 0
    %2258 = vmatpush1.bf16.msra.mxu0 %v2188
    %2259 = vmatprep.subr.bf16.mxu0 0
    %2260 = vmatpush1.bf16.msra.mxu0 %v2189
    %2261 = vmatprep.subr.bf16.mxu0 0
    %2262 = vmatpush1.bf16.msra.mxu0 %v2190
    %2263 = vmatprep.subr.bf16.mxu0 0
    %2264 = vmatpush1.bf16.msra.mxu0 %v2191
    %2265 = vmatprep.subr.bf16.mxu0 0
    %2266 = vmatpush1.bf16.msra.mxu0 %v2192
    %2267 = vmatprep.subr.bf16.mxu0 0
    %2268 = vmatpush1.bf16.msra.mxu0 %v2193
    %2269 = vmatprep.subr.bf16.mxu0 0
    %2270 = vmatpush1.bf16.msra.mxu0 %v2194
    %2271 = vmatprep.subr.bf16.mxu0 0
    %2272 = vmatpush1.bf16.msra.mxu0 %v2195
    %2273 = vmatprep.subr.bf16.mxu0 0
    %2274 = vmatpush1.bf16.msra.mxu0 %v2196
    %2275 = vmatprep.subr.bf16.mxu0 0
    %2276 = vmatpush1.bf16.msra.mxu0 %v2197
    %2277 = vmatprep.subr.bf16.mxu0 0
    %2278 = vmatpush1.bf16.msra.mxu0 %v2198
    %2279 = vmatprep.mubr.bf16.mxu0 %v1977
    %2280 = vmatmul.mubr.bf16.gmra.mrb[0].mxu0 %v1976
    %v2281 = vpop.f32.mrb[0].mxu0
    %v2282 = vadd.f32 %v2053, %v2281
    %v2283 = vpop.f32.mrb[0].mxu0
    %v2284 = vpop.f32.mrb[0].mxu0
    %v2285 = vadd.f32 %v2053, %v2284
    %v2286 = vpop.f32.mrb[0].mxu0
    %2287 = vmatprep.mubr.bf16.mxu0 %v1981
    %2288 = vmatmul.mubr.bf16.gmra.mrb[0].mxu0 %v1980
    %v2289 = vpop.f32.mrb[0].mxu0
    %v2290 = vadd.f32 %v2053, %v2289
    %v2291 = vpop.f32.mrb[0].mxu0
    %v2292 = vpop.f32.mrb[0].mxu0
    %v2293 = vadd.f32 %v2053, %v2292
    %v2294 = vpop.f32.mrb[0].mxu0
    %2295 = vdwg.mxu0
    %2296 = vmatprep.subr.bf16.mxu0 0
    %2297 = vmatpush1.bf16.msra.mxu0 %v2199
    %2298 = vmatprep.subr.bf16.mxu0 0
    %2299 = vmatpush1.bf16.msra.mxu0 %v2200
    %2300 = vmatprep.subr.bf16.mxu0 0
    %2301 = vmatpush1.bf16.msra.mxu0 %v2201
    %2302 = vmatprep.subr.bf16.mxu0 0
    %2303 = vmatpush1.bf16.msra.mxu0 %v2202
    %2304 = vmatprep.subr.bf16.mxu0 0
    %2305 = vmatpush1.bf16.msra.mxu0 %v2203
    %2306 = vmatprep.subr.bf16.mxu0 0
    %2307 = vmatpush1.bf16.msra.mxu0 %v2204
    %2308 = vmatprep.subr.bf16.mxu0 0
    %2309 = vmatpush1.bf16.msra.mxu0 %v2205
    %2310 = vmatprep.subr.bf16.mxu0 0
    %2311 = vmatpush1.bf16.msra.mxu0 %v2206
    %2312 = vmatprep.subr.bf16.mxu0 0
    %2313 = vmatpush1.bf16.msra.mxu0 %v2207
    %2314 = vmatprep.subr.bf16.mxu0 0
    %2315 = vmatpush1.bf16.msra.mxu0 %v2208
    %2316 = vmatprep.subr.bf16.mxu0 0
    %2317 = vmatpush1.bf16.msra.mxu0 %v2209
    %2318 = vmatprep.subr.bf16.mxu0 0
    %2319 = vmatpush1.bf16.msra.mxu0 %v2210
    %2320 = vmatprep.subr.bf16.mxu0 0
    %2321 = vmatpush1.bf16.msra.mxu0 %v2211
    %2322 = vmatprep.subr.bf16.mxu0 0
    %2323 = vmatpush1.bf16.msra.mxu0 %v2212
    %2324 = vmatprep.subr.bf16.mxu0 0
    %2325 = vmatpush1.bf16.msra.mxu0 %v2213
    %2326 = vmatprep.subr.bf16.mxu0 0
    %2327 = vmatpush1.bf16.msra.mxu0 %v2214
    %2328 = vmatprep.mubr.bf16.mxu0 %v1979
    %2329 = vmatmul.mubr.bf16.gmra.mrb[0].mxu0 %v1978
    %v2330 = vpop.f32.mrb[0].mxu0
    %v2331 = vadd.f32 %v2282, %v2330
    %v2332 = vpop.f32.mrb[0].mxu0
    %v2333 = vpop.f32.mrb[0].mxu0
    %v2334 = vadd.f32 %v2285, %v2333
    %v2335 = vpop.f32.mrb[0].mxu0
    %2336 = vmatprep.mubr.bf16.mxu0 %v1983
    %2337 = vmatmul.mubr.bf16.gmra.mrb[0].mxu0 %v1982
    %v2338 = vpop.f32.mrb[0].mxu0
    %v2339 = vadd.f32 %v2290, %v2338
    %v2340 = vpop.f32.mrb[0].mxu0
    %v2341 = vpop.f32.mrb[0].mxu0
    %v2342 = vadd.f32 %v2293, %v2341
    %v2343 = vpop.f32.mrb[0].mxu0
    %2344 = vdwg.mxu0
    %2345 = vst [vmem:[#allocation11] sm:$0xff] %v2331
    %2346 = vst [vmem:[#allocation11 + $0x8] sm:$0xff] %v2334
    %2347 = vst [vmem:[#allocation11 + $0x10] sm:$0xff] %v2339
    %2348 = vst [vmem:[#allocation11 + $0x18] sm:$0xff] %v2342
    // Predicated region
    $region74: #{tpu_custom_call.1} parent=1 // pred_check
      _
    $region75: #{tpu_custom_call.1} parent=1 // pred_check_branch
      %2350 = sbr.rel (0) target = $region77
    $region76: #{tpu_custom_call.1} parent=1 // pred_region
      %s2352 = ssub.s32 512, 512
      %2353 = vsyncadd [#allocation4], %s2352
      %s2354 = sshll.u32 [#allocation11], 4
      %s2355 = int_to_ptr.vmem [resolvable:$true] %s2354
      %2360 = dma.vmem_to_hbm [thread:$0]  %s2355, 512, %s13, [#allocation4], 128, 128, 8
    $region77: #{tpu_custom_call.1} parent=1 // pred_fallthru
      _
    // Predicated region
    $region78: #{tpu_custom_call.1} parent=1 // pred_check
      _
    $region79: #{tpu_custom_call.1} parent=1 // pred_check_branch
      %2362 = sbr.rel (0) target = $region81
    $region80: #{tpu_custom_call.1} parent=1 // pred_region
      %2363 = dma.done [#allocation4], 512
    $region81: #{tpu_custom_call.1} parent=1 // pred_fallthru
      _
    %2364 = vsyncpa [#allocation3], 1
    %2365 = vsyncpa [#allocation6], 1
    %2366 = vsyncpa [#allocation9], 1
    %2367 = vsyncpa [#allocation4], 1

</llo_original>
